<compile_context>
chip_gen: v6e
topology: v6e:2x2x1
jax: 0.10.0
libtpu: 0.0.40
codegen_flags: <defaults>
</compile_context>

<pallas_src>
import functools

import numpy as np
import jax
import jax.numpy as jnp
from jax import lax
from jax.experimental import pallas as pl
from jax.experimental.pallas import tpu as pltpu

LANE = 128


# ----------------------------- Pallas kernel -------------------------------

def _tcn_kernel(x_ref, wk_ref, bconv_ref, wfc_ref, bfc_ref, out_ref, acc_ref,
                *, T, K, dilation, P):
    """Fused TCNForecast forward for one batch tile.

    x_ref:     (B_tile, T, D_in)       input block (batch, time, channels)
    wk_ref:    (K, D_in, H_pad)        conv weight, tap-major, transposed, lane-padded
    bconv_ref: (1, 1, H_pad)           conv bias (lane-padded with zeros)
    wfc_ref:   (1, 1, H_pad)           fc weight row (lane-padded with zeros)
    bfc_ref:   (1, 1)  [SMEM]          fc bias scalar
    out_ref:   (B_tile, 1, LANE)       forecast, broadcast across lanes (lane-dense store)
    acc_ref:   (B_tile, T_out, H_pad)  VMEM scratch holding the conv feature map
    """
    B_tile = x_ref.shape[0]
    D_in = x_ref.shape[2]
    H_pad = wk_ref.shape[2]
    T_out = T + P

    # Scratch persists across grid steps -> re-zero per batch tile.
    acc_ref[...] = jnp.zeros_like(acc_ref)

    x = x_ref[...]  # load once; reused by every tap

    # Conv1d(padding=(K-1)*dilation) as K shifted batched MXU matmuls.
    # Tap k contributes x[:, 0:T, :] @ W_k to output rows [P - k*d, P - k*d + T).
    # The zero padding of the PyTorch conv is handled by these offsets (zero contribution elsewhere).
    for k in range(K):
        off = P - k * dilation  # static Python int
        w_k = jnp.broadcast_to(wk_ref[k], (B_tile, D_in, H_pad))
        contrib = lax.dot_general(
            x, w_k,
            dimension_numbers=(((2,), (1,)), ((0,), (0,))),
            preferred_element_type=jnp.float32)            # (B_tile, T, H_pad)
        acc_ref[:, off:off + T, :] += contrib

    # Fused epilogue. The module only consumes the LAST conv position: c[:, :, -1].
    # (The full feature map above never leaves VMEM.)
    last = acc_ref[:, T_out - 1:T_out, :]                  # (B_tile, 1, H_pad)
    h = jnp.maximum(last + bconv_ref[...], 0.0)            # bias + ReLU; dropout = identity (eval)
    # fc(hidden -> 1) as a VPU multiply + lane reduce (padded lanes are exactly zero).
    y = jnp.sum(h * wfc_ref[...], axis=-1, keepdims=True) + bfc_ref[0, 0]   # (B_tile, 1, 1)
    out_ref[...] = jnp.broadcast_to(y, out_ref.shape)      # lane-dense (B_tile, 1, LANE) store


# ------------------------------ JAX wrapper ---------------------------------

def tcn_forecast_forward(x, params, *, kernel_size, dilation, b_tile=8):
    """x: (B, T, input_size) -> (B,), matching TCNForecast.forward in eval mode."""
    x = x.astype(jnp.float32)
    B, T, D_in = x.shape
    K = kernel_size
    P = (K - 1) * dilation
    T_out = T + P

    wk = params["conv_w_t"]        # (K, D_in, H_pad)
    bconv = params["conv_b"]       # (1, 1, H_pad)
    wfc = params["fc_w"]           # (1, 1, H_pad)
    bfc = params["fc_b"]           # (1, 1)  -> SMEM
    H_pad = wk.shape[-1]

    b_tile = min(b_tile, B)
    B_pad = ((B + b_tile - 1) // b_tile) * b_tile
    if B_pad != B:
        x = jnp.pad(x, ((0, B_pad - B), (0, 0), (0, 0)))
    grid = (B_pad // b_tile,)

    kernel = functools.partial(_tcn_kernel, T=T, K=K, dilation=dilation, P=P)

    out = pl.pallas_call(
        kernel,
        out_shape=jax.ShapeDtypeStruct((B_pad, 1, LANE), jnp.float32),
        grid=grid,
        in_specs=[
            pl.BlockSpec((b_tile, T, D_in), lambda i: (i, 0, 0)),     # x: tiled over batch
            pl.BlockSpec((K, D_in, H_pad), lambda i: (0, 0, 0)),      # conv weight (all taps)
            pl.BlockSpec((1, 1, H_pad), lambda i: (0, 0, 0)),         # conv bias
            pl.BlockSpec((1, 1, H_pad), lambda i: (0, 0, 0)),         # fc weight row
            pl.BlockSpec(memory_space=pltpu.MemorySpace.SMEM),        # fc bias scalar
        ],
        out_specs=pl.BlockSpec((b_tile, 1, LANE), lambda i: (i, 0, 0)),
        scratch_shapes=[pltpu.VMEM((b_tile, T_out, H_pad), jnp.float32)],
        compiler_params=pltpu.CompilerParams(
            dimension_semantics=("parallel",)),                       # batch tiles are independent
    )(x, wk, bconv, wfc, bfc)

    return out[:B, 0, 0]


# --------------------------- parameter creation ------------------------------

def init_params(key, input_size, hidden_size, kernel_size):
    """PyTorch-style init; stored both in torch layout (for the reference) and in the
    kernel layout (tap-major transposed conv weight, hidden dim zero-padded to 128 lanes)."""
    H_pad = ((hidden_size + LANE - 1) // LANE) * LANE
    k1, k2, k3, k4 = jax.random.split(key, 4)
    conv_scale = 1.0 / np.sqrt(input_size * kernel_size)
    conv_w = jax.random.uniform(k1, (hidden_size, input_size, kernel_size),
                                jnp.float32, -conv_scale, conv_scale)
    conv_b = jax.random.uniform(k2, (hidden_size,), jnp.float32, -conv_scale, conv_scale)
    fc_scale = 1.0 / np.sqrt(hidden_size)
    fc_w = jax.random.uniform(k3, (1, hidden_size), jnp.float32, -fc_scale, fc_scale)
    fc_b = jax.random.uniform(k4, (1,), jnp.float32, -fc_scale, fc_scale)

    conv_w_t = jnp.transpose(conv_w, (2, 1, 0))                              # (K, D_in, H)
    conv_w_t = jnp.pad(conv_w_t, ((0, 0), (0, 0), (0, H_pad - hidden_size)))  # lane-pad with zeros
    conv_b_p = jnp.pad(conv_b, (0, H_pad - hidden_size)).reshape(1, 1, H_pad)
    fc_w_p = jnp.pad(fc_w[0], (0, H_pad - hidden_size)).reshape(1, 1, H_pad)
    fc_b_p = fc_b.reshape(1, 1)

    return {
        "torch": {"conv_w": conv_w, "conv_b": conv_b, "fc_w": fc_w, "fc_b": fc_b},
        "conv_w_t": conv_w_t, "conv_b": conv_b_p, "fc_w": fc_w_p, "fc_b": fc_b_p,
    }


# ----------------------------- pure-JAX reference ----------------------------

def reference_forward(x, tp, *, kernel_size, dilation):
    """Literal translation of TCNForecast.forward (eval mode)."""
    P = (kernel_size - 1) * dilation
    xc = jnp.transpose(x, (0, 2, 1)).astype(jnp.float32)        # x.permute(0, 2, 1) -> (B, C_in, T)
    c = lax.conv_general_dilated(
        xc, tp["conv_w"], window_strides=(1,), padding=[(P, P)],
        rhs_dilation=(dilation,), dimension_numbers=("NCH", "OIH", "NCH"))
    c = c + tp["conv_b"][None, :, None]
    c = jnp.maximum(c, 0.0)                                      # ReLU; dropout = identity in eval
    last = c[:, :, -1]                                           # (B, H)
    y = last @ tp["fc_w"].T + tp["fc_b"][None, :]                # (B, 1)
    return jnp.squeeze(y)


# --------------------------------- main ---------------------------------------

if __name__ == "__main__":
    B, T, INPUT_SIZE, HIDDEN = 8, 16, 8, 32

    key = jax.random.PRNGKey(0)
    key, kx = jax.random.split(key)
    x = jax.random.normal(kx, (B, T, INPUT_SIZE), jnp.float32)

    for cfg in (dict(kernel_size=2, dilation=1), dict(kernel_size=3, dilation=2)):
        key, kp = jax.random.split(key)
        params = init_params(kp, INPUT_SIZE, HIDDEN, cfg["kernel_size"])

        out = jax.block_until_ready(
            tcn_forecast_forward(x, params, kernel_size=cfg["kernel_size"],
                                 dilation=cfg["dilation"]))
        ref = jax.block_until_ready(
            reference_forward(x, params["torch"], kernel_size=cfg["kernel_size"],
                              dilation=cfg["dilation"]))

        assert out.shape == (B,), out.shape
        np.testing.assert_allclose(np.asarray(out), np.asarray(ref),
                                   rtol=1e-4, atol=1e-5)

    print("KERNEL_OK")
</pallas_src>

<mosaic_0001>
module attributes {stable_mosaic.version = 11 : i64} {
  func.func @_tcn_kernel(%arg0: i32, %arg1: memref<8x16x8xf32, #tpu.memory_space<vmem>>, %arg2: memref<2x8x128xf32, #tpu.memory_space<vmem>>, %arg3: memref<1x1x128xf32, #tpu.memory_space<vmem>>, %arg4: memref<1x1x128xf32, #tpu.memory_space<vmem>>, %arg5: memref<1x1xf32, #tpu.memory_space<smem>>, %arg6: memref<8x1x128xf32, #tpu.memory_space<vmem>>, %arg7: memref<8x17x128xf32, #tpu.memory_space<vmem>>) attributes {dimension_semantics = [#tpu.dimension_semantics<parallel>], iteration_bounds = array<i64: 1>, scalar_prefetch = 0 : i64, scratch_operands = 1 : i64, tpu.core_type = #tpu.core_type<tc>, window_params = [{transform_indices = @transform_0, window_bounds = array<i64: 8, 16, 8>}, {pipeline_mode = #tpu.pipeline_mode<synchronous>, transform_indices = @transform_1, window_bounds = array<i64: 2, 8, 128>}, {pipeline_mode = #tpu.pipeline_mode<synchronous>, transform_indices = @transform_2, window_bounds = array<i64: 1, 1, 128>}, {pipeline_mode = #tpu.pipeline_mode<synchronous>, transform_indices = @transform_3, window_bounds = array<i64: 1, 1, 128>}, {transform_indices = @transform_4, window_bounds = array<i64: 1, 1>}, {transform_indices = @transform_5, window_bounds = array<i64: 8, 1, 128>}]} {
    %cst = arith.constant 0.000000e+00 : f32
    %0 = vector.broadcast %cst : f32 to vector<8x17x128xf32>
    %c0 = arith.constant 0 : index
    %c0_0 = arith.constant 0 : index
    %c0_1 = arith.constant 0 : index
    %1 = vector.load %arg7[%c0, %c0_0, %c0_1] : memref<8x17x128xf32, #tpu.memory_space<vmem>>, vector<8x17x128xf32>
    tpu.vector_store %arg7[%c0, %c0_0, %c0_1], %0 {strides = array<i32>} : memref<8x17x128xf32, #tpu.memory_space<vmem>>, vector<8x17x128xf32>,
    %c0_2 = arith.constant 0 : index
    %c0_3 = arith.constant 0 : index
    %c0_4 = arith.constant 0 : index
    %2 = vector.load %arg1[%c0_2, %c0_3, %c0_4] : memref<8x16x8xf32, #tpu.memory_space<vmem>>, vector<8x16x8xf32>
    %c0_5 = arith.constant 0 : index
    %c0_6 = arith.constant 0 : index
    %c0_7 = arith.constant 0 : index
    %3 = vector.load %arg2[%c0_5, %c0_6, %c0_7] : memref<2x8x128xf32, #tpu.memory_space<vmem>>, vector<1x8x128xf32>
    %4 = vector.shape_cast %3 : vector<1x8x128xf32> to vector<8x128xf32>
    %5 = vector.shape_cast %4 : vector<8x128xf32> to vector<1x8x128xf32>
    %6 = vector.broadcast %5 : vector<1x8x128xf32> to vector<8x8x128xf32>
    %cst_8 = arith.constant dense<0.000000e+00> : vector<8x16x128xf32>
    %7 = tpu.matmul %2, %6, %cst_8 {dimension_numbers = #tpu.dot_dimension_numbers<[2], [1], [1], [2], [0, 0, 0, 1, 1, 2], [0], [0]>} : vector<8x16x8xf32>, vector<8x8x128xf32>, vector<8x16x128xf32> -> vector<8x16x128xf32>
    %c0_9 = arith.constant 0 : index
    %c1 = arith.constant 1 : index
    %c0_10 = arith.constant 0 : index
    %8 = vector.load %arg7[%c0_9, %c1, %c0_10] : memref<8x17x128xf32, #tpu.memory_space<vmem>>, vector<8x16x128xf32>
    %9 = arith.addf %8, %7 : vector<8x16x128xf32>
    %c0_11 = arith.constant 0 : index
    %c1_12 = arith.constant 1 : index
    %c0_13 = arith.constant 0 : index
    %10 = vector.load %arg7[%c0_11, %c1_12, %c0_13] : memref<8x17x128xf32, #tpu.memory_space<vmem>>, vector<8x16x128xf32>
    tpu.vector_store %arg7[%c0_11, %c1_12, %c0_13], %9 {strides = array<i32>} : memref<8x17x128xf32, #tpu.memory_space<vmem>>, vector<8x16x128xf32>,
    %c1_14 = arith.constant 1 : index
    %c0_15 = arith.constant 0 : index
    %c0_16 = arith.constant 0 : index
    %11 = vector.load %arg2[%c1_14, %c0_15, %c0_16] : memref<2x8x128xf32, #tpu.memory_space<vmem>>, vector<1x8x128xf32>
    %12 = vector.shape_cast %11 : vector<1x8x128xf32> to vector<8x128xf32>
    %13 = vector.shape_cast %12 : vector<8x128xf32> to vector<1x8x128xf32>
    %14 = vector.broadcast %13 : vector<1x8x128xf32> to vector<8x8x128xf32>
    %cst_17 = arith.constant dense<0.000000e+00> : vector<8x16x128xf32>
    %15 = tpu.matmul %2, %14, %cst_17 {dimension_numbers = #tpu.dot_dimension_numbers<[2], [1], [1], [2], [0, 0, 0, 1, 1, 2], [0], [0]>} : vector<8x16x8xf32>, vector<8x8x128xf32>, vector<8x16x128xf32> -> vector<8x16x128xf32>
    %c0_18 = arith.constant 0 : index
    %c0_19 = arith.constant 0 : index
    %c0_20 = arith.constant 0 : index
    %16 = vector.load %arg7[%c0_18, %c0_19, %c0_20] : memref<8x17x128xf32, #tpu.memory_space<vmem>>, vector<8x16x128xf32>
    %17 = arith.addf %16, %15 : vector<8x16x128xf32>
    %c0_21 = arith.constant 0 : index
    %c0_22 = arith.constant 0 : index
    %c0_23 = arith.constant 0 : index
    %18 = vector.load %arg7[%c0_21, %c0_22, %c0_23] : memref<8x17x128xf32, #tpu.memory_space<vmem>>, vector<8x16x128xf32>
    tpu.vector_store %arg7[%c0_21, %c0_22, %c0_23], %17 {strides = array<i32>} : memref<8x17x128xf32, #tpu.memory_space<vmem>>, vector<8x16x128xf32>,
    %c0_24 = arith.constant 0 : index
    %c16 = arith.constant 16 : index
    %c0_25 = arith.constant 0 : index
    %19 = vector.load %arg7[%c0_24, %c16, %c0_25] : memref<8x17x128xf32, #tpu.memory_space<vmem>>, vector<8x1x128xf32>
    %c0_26 = arith.constant 0 : index
    %c0_27 = arith.constant 0 : index
    %c0_28 = arith.constant 0 : index
    %20 = vector.load %arg3[%c0_26, %c0_27, %c0_28] : memref<1x1x128xf32, #tpu.memory_space<vmem>>, vector<1x1x128xf32>
    %21 = vector.broadcast %20 : vector<1x1x128xf32> to vector<8x1x128xf32>
    %22 = arith.addf %19, %21 : vector<8x1x128xf32>
    %cst_29 = arith.constant 0.000000e+00 : f32
    %23 = vector.broadcast %cst_29 : f32 to vector<8x1x128xf32>
    %24 = arith.maximumf %22, %23 : vector<8x1x128xf32>
    %c0_30 = arith.constant 0 : index
    %c0_31 = arith.constant 0 : index
    %c0_32 = arith.constant 0 : index
    %25 = vector.load %arg4[%c0_30, %c0_31, %c0_32] : memref<1x1x128xf32, #tpu.memory_space<vmem>>, vector<1x1x128xf32>
    %26 = vector.broadcast %25 : vector<1x1x128xf32> to vector<8x1x128xf32>
    %27 = arith.mulf %24, %26 : vector<8x1x128xf32>
    %cst_33 = arith.constant dense<0.000000e+00> : vector<8x1xf32>
    %28 = vector.multi_reduction <add>, %27, %cst_33 [2] : vector<8x1x128xf32> to vector<8x1xf32>
    %29 = vector.shape_cast %28 : vector<8x1xf32> to vector<8x1x1xf32>
    %c0_34 = arith.constant 0 : index
    %c0_35 = arith.constant 0 : index
    %30 = memref.load %arg5[%c0_34, %c0_35] : memref<1x1xf32, #tpu.memory_space<smem>>
    %31 = vector.broadcast %30 : f32 to vector<8x1x1xf32>
    %32 = arith.addf %29, %31 : vector<8x1x1xf32>
    %33 = vector.shape_cast %32 : vector<8x1x1xf32> to vector<8x1x1xf32>
    %34 = vector.broadcast %33 : vector<8x1x1xf32> to vector<8x1x128xf32>
    %c0_36 = arith.constant 0 : index
    %c0_37 = arith.constant 0 : index
    %c0_38 = arith.constant 0 : index
    %35 = vector.load %arg6[%c0_36, %c0_37, %c0_38] : memref<8x1x128xf32, #tpu.memory_space<vmem>>, vector<8x1x128xf32>
    tpu.vector_store %arg6[%c0_36, %c0_37, %c0_38], %34 {strides = array<i32>} : memref<8x1x128xf32, #tpu.memory_space<vmem>>, vector<8x1x128xf32>,
    return
  }
  func.func @transform_0(%arg0: i32) -> (i32, i32, i32) {
    %c0_i32 = arith.constant 0 : i32
    %c0_i32_0 = arith.constant 0 : i32
    %c0_i32_1 = arith.constant 0 : i32
    return %arg0, %c0_i32, %c0_i32_0 : i32, i32, i32
  }
  func.func @transform_1(%arg0: i32) -> (i32, i32, i32) {
    %c0_i32 = arith.constant 0 : i32
    %c0_i32_0 = arith.constant 0 : i32
    %c0_i32_1 = arith.constant 0 : i32
    %c0_i32_2 = arith.constant 0 : i32
    return %c0_i32, %c0_i32_0, %c0_i32_1 : i32, i32, i32
  }
  func.func @transform_2(%arg0: i32) -> (i32, i32, i32) {
    %c0_i32 = arith.constant 0 : i32
    %c0_i32_0 = arith.constant 0 : i32
    %c0_i32_1 = arith.constant 0 : i32
    %c0_i32_2 = arith.constant 0 : i32
    return %c0_i32, %c0_i32_0, %c0_i32_1 : i32, i32, i32
  }
  func.func @transform_3(%arg0: i32) -> (i32, i32, i32) {
    %c0_i32 = arith.constant 0 : i32
    %c0_i32_0 = arith.constant 0 : i32
    %c0_i32_1 = arith.constant 0 : i32
    %c0_i32_2 = arith.constant 0 : i32
    return %c0_i32, %c0_i32_0, %c0_i32_1 : i32, i32, i32
  }
  func.func @transform_4(%arg0: i32) -> (i32, i32) {
    %c0_i32 = arith.constant 0 : i32
    %c0_i32_0 = arith.constant 0 : i32
    %c0_i32_1 = arith.constant 0 : i32
    return %c0_i32, %c0_i32_0 : i32, i32
  }
  func.func @transform_5(%arg0: i32) -> (i32, i32, i32) {
    %c0_i32 = arith.constant 0 : i32
    %c0_i32_0 = arith.constant 0 : i32
    %c0_i32_1 = arith.constant 0 : i32
    return %arg0, %c0_i32, %c0_i32_0 : i32, i32, i32
  }
}

</mosaic_0001>

<llo_original>
// kernel: tpu_custom_call.1
$region0: #{tpu_custom_call.1}
  #allocation0 [shape = 'u32[]', space=smem, size = 0x4, offset = 0x4, fixed_abs, tag = 'smem constant byte address 0x4 - core index']
  #allocation1 [shape = 'u32[144,128]{1,0:T(1,128)}', space=vmem, size = 0x12000, scoped, tag = 'internal scratch']
  #allocation2 [shape = 'f32[8,17,128]{2,1,0:T(8,128)}', space=vmem, size = 0x18000, scoped, tag = 'scratch operand']
  #allocation3 [shape = 'f32[1,1]{1,0:T(1,128)S(6)}', space=smem, size = 0x200, scoped, tag = 'scoped memory for tpu_custom_call.1']
  %s0 = inlined_call_operand.vmem [shape: f32[8,16,8], index: 0, kind: input, shape index: {}]
  %s1 = inlined_call_operand.vmem [shape: f32[2,8,128], index: 1, kind: input, shape index: {}]
  %s2 = inlined_call_operand.vmem [shape: f32[1,1,128], index: 2, kind: input, shape index: {}]
  %s3 = inlined_call_operand.vmem [shape: f32[1,1,128], index: 3, kind: input, shape index: {}]
  %s4 = inlined_call_operand.<no memory space> [shape: f32[1,1], index: 4, kind: input, shape index: {}]
  %s5 = inlined_call_operand.hbm [shape: f32[8,1,128], index: 5, kind: output, shape index: {}]
  %s6 = sld [smem:[#allocation0]]
  $region30: #{tpu_custom_call.1} parent=0
    _
  %s8 = ssub.s32 1, %s6
  %s9 = scalar_select 0, %s8, %s6
  %10 = sst [smem:[#allocation3]] %s4
  $region1: #{tpu_custom_call.1} parent=0
    #allocation4 [shape = 'u8[4096]{0}', space=vmem, size = 0x1000, scoped, tag = 'output window, operand 0, single buffered']
    #allocation5 [shape = 's32[1]{0}', space=sflag, size = 0x4, scoped, tag = 'scoped memory for tpu_custom_call.1']
    %11 = vsyncpa [#allocation5], 0
    // Predicated region
    $region2: #{tpu_custom_call.1} parent=1 // pred_check
      _
    $region3: #{tpu_custom_call.1} parent=1 // pred_check_branch
      %13 = sbr.rel (0) target = $region5
    $region4: #{tpu_custom_call.1} parent=1 // pred_region
      _
    $region5: #{tpu_custom_call.1} parent=1 // pred_fallthru
      _
    // Predicated region
    $region6: #{tpu_custom_call.1} parent=1 // pred_check
      _
    $region7: #{tpu_custom_call.1} parent=1 // pred_check_branch
      %15 = sbr.rel (0) target = $region9
    $region8: #{tpu_custom_call.1} parent=1 // pred_region
      _
    $region9: #{tpu_custom_call.1} parent=1 // pred_fallthru
      _
    // Predicated region
    $region10: #{tpu_custom_call.1} parent=1 // pred_check
      _
    $region11: #{tpu_custom_call.1} parent=1 // pred_check_branch
      %17 = sbr.rel (0) target = $region13
    $region12: #{tpu_custom_call.1} parent=1 // pred_region
      _
    $region13: #{tpu_custom_call.1} parent=1 // pred_fallthru
      _
    // Predicated region
    $region14: #{tpu_custom_call.1} parent=1 // pred_check
      _
    $region15: #{tpu_custom_call.1} parent=1 // pred_check_branch
      %19 = sbr.rel (0) target = $region17
    $region16: #{tpu_custom_call.1} parent=1 // pred_region
      _
    $region17: #{tpu_custom_call.1} parent=1 // pred_fallthru
      _
    // Predicated region
    $region18: #{tpu_custom_call.1} parent=1 // pred_check
      _
    $region19: #{tpu_custom_call.1} parent=1 // pred_check_branch
      %21 = sbr.rel (0) target = $region21
    $region20: #{tpu_custom_call.1} parent=1 // pred_region
      _
    $region21: #{tpu_custom_call.1} parent=1 // pred_fallthru
      _
    %22 = vst [vmem:[#allocation2] sm:$0xff] 0.0
    %23 = vst [vmem:[#allocation2 + $0x8] sm:$0xff] 0.0
    %24 = vst [vmem:[#allocation2 + $0x10] sm:$0x1] 0.0
    %25 = vst [vmem:[#allocation2 + $0x18] sm:$0xff] 0.0
    %26 = vst [vmem:[#allocation2 + $0x20] sm:$0xff] 0.0
    %27 = vst [vmem:[#allocation2 + $0x28] sm:$0x1] 0.0
    %28 = vst [vmem:[#allocation2 + $0x30] sm:$0xff] 0.0
    %29 = vst [vmem:[#allocation2 + $0x38] sm:$0xff] 0.0
    %30 = vst [vmem:[#allocation2 + $0x40] sm:$0x1] 0.0
    %31 = vst [vmem:[#allocation2 + $0x48] sm:$0xff] 0.0
    %32 = vst [vmem:[#allocation2 + $0x50] sm:$0xff] 0.0
    %33 = vst [vmem:[#allocation2 + $0x58] sm:$0x1] 0.0
    %34 = vst [vmem:[#allocation2 + $0x60] sm:$0xff] 0.0
    %35 = vst [vmem:[#allocation2 + $0x68] sm:$0xff] 0.0
    %36 = vst [vmem:[#allocation2 + $0x70] sm:$0x1] 0.0
    %37 = vst [vmem:[#allocation2 + $0x78] sm:$0xff] 0.0
    %38 = vst [vmem:[#allocation2 + $0x80] sm:$0xff] 0.0
    %39 = vst [vmem:[#allocation2 + $0x88] sm:$0x1] 0.0
    %40 = vst [vmem:[#allocation2 + $0x90] sm:$0xff] 0.0
    %41 = vst [vmem:[#allocation2 + $0x98] sm:$0xff] 0.0
    %42 = vst [vmem:[#allocation2 + $0xa0] sm:$0x1] 0.0
    %43 = vst [vmem:[#allocation2 + $0xa8] sm:$0xff] 0.0
    %44 = vst [vmem:[#allocation2 + $0xb0] sm:$0xff] 0.0
    %45 = vst [vmem:[#allocation2 + $0xb8] sm:$0x1] 0.0
    %v46 = vld [vmem:[%s0] sm:$0xff]
    %v47 = vld [vmem:[%s0 + $0x8] sm:$0xff]
    %v48 = vld [vmem:[%s0 + $0x10] sm:$0xff]
    %v49 = vld [vmem:[%s0 + $0x18] sm:$0xff]
    %v50 = vld [vmem:[%s0 + $0x20] sm:$0xff]
    %v51 = vld [vmem:[%s0 + $0x28] sm:$0xff]
    %v52 = vld [vmem:[%s0 + $0x30] sm:$0xff]
    %v53 = vld [vmem:[%s0 + $0x38] sm:$0xff]
    %v54 = vld [vmem:[%s0 + $0x40] sm:$0xff]
    %v55 = vld [vmem:[%s0 + $0x48] sm:$0xff]
    %v56 = vld [vmem:[%s0 + $0x50] sm:$0xff]
    %v57 = vld [vmem:[%s0 + $0x58] sm:$0xff]
    %v58 = vld [vmem:[%s0 + $0x60] sm:$0xff]
    %v59 = vld [vmem:[%s0 + $0x68] sm:$0xff]
    %v60 = vld [vmem:[%s0 + $0x70] sm:$0xff]
    %v61 = vld [vmem:[%s0 + $0x78] sm:$0xff]
    %v62 = vld [vmem:[%s1] sm:$0xff]
    %vm63 = vcmask 64512
    %v65 = vsel %vm63, %v46, 0
    %v68 = vsel %vm63, %v47, 0
    %70 = vmatprep.subr.mxu0 0.0
    %71 = vmatpush1.msra.mxu0 0.0
    %72 = vmatprep.subr.mxu0 0.0
    %73 = vmatpush1.msra.mxu0 0.0
    %74 = vmatprep.subr.mxu0 0.0
    %75 = vmatpush1.msra.mxu0 0.0
    %76 = vmatprep.subr.mxu0 0.0
    %77 = vmatpush1.msra.mxu0 0.0
    %78 = vmatprep.subr.mxu0 0.0
    %79 = vmatpush1.msra.mxu0 0.0
    %80 = vmatprep.subr.mxu0 0.0
    %81 = vmatpush1.msra.mxu0 0.0
    %82 = vmatprep.subr.mxu0 0.0
    %83 = vmatpush1.msra.mxu0 0.0
    %84 = vmatprep.subr.mxu0 0.0
    %85 = vmatpush1.msra.mxu0 0.0
    %86 = vmatprep.subr.mxu0 0.0
    %87 = vmatpush1.msra.mxu0 0.0
    %88 = vmatprep.subr.mxu0 0.0
    %89 = vmatpush1.msra.mxu0 0.0
    %90 = vmatprep.subr.mxu0 0.0
    %91 = vmatpush1.msra.mxu0 0.0
    %92 = vmatprep.subr.mxu0 0.0
    %93 = vmatpush1.msra.mxu0 0.0
    %94 = vmatprep.subr.mxu0 0.0
    %95 = vmatpush1.msra.mxu0 0.0
    %96 = vmatprep.subr.mxu0 0.0
    %97 = vmatpush1.msra.mxu0 0.0
    %98 = vmatprep.subr.mxu0 0.0
    %99 = vmatpush1.msra.mxu0 0.0
    %100 = vmatprep.subr.mxu0 0.0
    %101 = vmatpush1.msra.mxu0 %v62
    %102 = vmatprep.subr.mxu0 0.0
    %103 = vmatpush2.msra.mxu0 0.0
    %104 = vmatprep.subr.mxu0 0.0
    %105 = vmatpush2.msra.mxu0 0.0
    %106 = vmatprep.subr.mxu0 0.0
    %107 = vmatpush2.msra.mxu0 0.0
    %108 = vmatprep.subr.mxu0 0.0
    %109 = vmatpush2.msra.mxu0 0.0
    %110 = vmatprep.subr.mxu0 0.0
    %111 = vmatpush2.msra.mxu0 0.0
    %112 = vmatprep.subr.mxu0 0.0
    %113 = vmatpush2.msra.mxu0 0.0
    %114 = vmatprep.subr.mxu0 0.0
    %115 = vmatpush2.msra.mxu0 0.0
    %116 = vmatprep.subr.mxu0 0.0
    %117 = vmatpush2.msra.mxu0 0.0
    %118 = vmatprep.subr.mxu0 0.0
    %119 = vmatpush2.msra.mxu0 0.0
    %120 = vmatprep.subr.mxu0 0.0
    %121 = vmatpush2.msra.mxu0 0.0
    %122 = vmatprep.subr.mxu0 0.0
    %123 = vmatpush2.msra.mxu0 0.0
    %124 = vmatprep.subr.mxu0 0.0
    %125 = vmatpush2.msra.mxu0 0.0
    %126 = vmatprep.subr.mxu0 0.0
    %127 = vmatpush2.msra.mxu0 0.0
    %128 = vmatprep.subr.mxu0 0.0
    %129 = vmatpush2.msra.mxu0 0.0
    %130 = vmatprep.subr.mxu0 0.0
    %131 = vmatpush2.msra.mxu0 0.0
    %132 = vmatprep.subr.mxu0 0.0
    %133 = vmatpush2.msra.mxu0 0.0
    %134 = vmatprep.mubr.f32.mxu0 0.0
    %135 = vmatmul.mubr.f32.gmra.mxu0 %v65
    %v136 = vpop.f32.mrf.mxu0
    %v137 = vadd.f32 0.0, %v136
    %v138 = vpop.f32.mrf.mxu0
    %139 = vmatprep.mubr.f32.mxu0 0.0
    %140 = vmatmul.mubr.f32.gmra.mxu0 %v68
    %v141 = vpop.f32.mrf.mxu0
    %v142 = vadd.f32 0.0, %v141
    %v143 = vpop.f32.mrf.mxu0
    %144 = vdwg.mxu0
    %v146 = vsel %vm63, %v48, 0
    %v149 = vsel %vm63, %v49, 0
    %151 = vmatprep.subr.mxu0 0.0
    %152 = vmatpush1.msra.mxu0 0.0
    %153 = vmatprep.subr.mxu0 0.0
    %154 = vmatpush1.msra.mxu0 0.0
    %155 = vmatprep.subr.mxu0 0.0
    %156 = vmatpush1.msra.mxu0 0.0
    %157 = vmatprep.subr.mxu0 0.0
    %158 = vmatpush1.msra.mxu0 0.0
    %159 = vmatprep.subr.mxu0 0.0
    %160 = vmatpush1.msra.mxu0 0.0
    %161 = vmatprep.subr.mxu0 0.0
    %162 = vmatpush1.msra.mxu0 0.0
    %163 = vmatprep.subr.mxu0 0.0
    %164 = vmatpush1.msra.mxu0 0.0
    %165 = vmatprep.subr.mxu0 0.0
    %166 = vmatpush1.msra.mxu0 0.0
    %167 = vmatprep.subr.mxu0 0.0
    %168 = vmatpush1.msra.mxu0 0.0
    %169 = vmatprep.subr.mxu0 0.0
    %170 = vmatpush1.msra.mxu0 0.0
    %171 = vmatprep.subr.mxu0 0.0
    %172 = vmatpush1.msra.mxu0 0.0
    %173 = vmatprep.subr.mxu0 0.0
    %174 = vmatpush1.msra.mxu0 0.0
    %175 = vmatprep.subr.mxu0 0.0
    %176 = vmatpush1.msra.mxu0 0.0
    %177 = vmatprep.subr.mxu0 0.0
    %178 = vmatpush1.msra.mxu0 0.0
    %179 = vmatprep.subr.mxu0 0.0
    %180 = vmatpush1.msra.mxu0 0.0
    %181 = vmatprep.subr.mxu0 0.0
    %182 = vmatpush1.msra.mxu0 %v62
    %183 = vmatprep.subr.mxu0 0.0
    %184 = vmatpush2.msra.mxu0 0.0
    %185 = vmatprep.subr.mxu0 0.0
    %186 = vmatpush2.msra.mxu0 0.0
    %187 = vmatprep.subr.mxu0 0.0
    %188 = vmatpush2.msra.mxu0 0.0
    %189 = vmatprep.subr.mxu0 0.0
    %190 = vmatpush2.msra.mxu0 0.0
    %191 = vmatprep.subr.mxu0 0.0
    %192 = vmatpush2.msra.mxu0 0.0
    %193 = vmatprep.subr.mxu0 0.0
    %194 = vmatpush2.msra.mxu0 0.0
    %195 = vmatprep.subr.mxu0 0.0
    %196 = vmatpush2.msra.mxu0 0.0
    %197 = vmatprep.subr.mxu0 0.0
    %198 = vmatpush2.msra.mxu0 0.0
    %199 = vmatprep.subr.mxu0 0.0
    %200 = vmatpush2.msra.mxu0 0.0
    %201 = vmatprep.subr.mxu0 0.0
    %202 = vmatpush2.msra.mxu0 0.0
    %203 = vmatprep.subr.mxu0 0.0
    %204 = vmatpush2.msra.mxu0 0.0
    %205 = vmatprep.subr.mxu0 0.0
    %206 = vmatpush2.msra.mxu0 0.0
    %207 = vmatprep.subr.mxu0 0.0
    %208 = vmatpush2.msra.mxu0 0.0
    %209 = vmatprep.subr.mxu0 0.0
    %210 = vmatpush2.msra.mxu0 0.0
    %211 = vmatprep.subr.mxu0 0.0
    %212 = vmatpush2.msra.mxu0 0.0
    %213 = vmatprep.subr.mxu0 0.0
    %214 = vmatpush2.msra.mxu0 0.0
    %215 = vmatprep.mubr.f32.mxu0 0.0
    %216 = vmatmul.mubr.f32.gmra.mxu0 %v146
    %v217 = vpop.f32.mrf.mxu0
    %v218 = vadd.f32 0.0, %v217
    %v219 = vpop.f32.mrf.mxu0
    %220 = vmatprep.mubr.f32.mxu0 0.0
    %221 = vmatmul.mubr.f32.gmra.mxu0 %v149
    %v222 = vpop.f32.mrf.mxu0
    %v223 = vadd.f32 0.0, %v222
    %v224 = vpop.f32.mrf.mxu0
    %225 = vdwg.mxu0
    %v227 = vsel %vm63, %v50, 0
    %v230 = vsel %vm63, %v51, 0
    %232 = vmatprep.subr.mxu0 0.0
    %233 = vmatpush1.msra.mxu0 0.0
    %234 = vmatprep.subr.mxu0 0.0
    %235 = vmatpush1.msra.mxu0 0.0
    %236 = vmatprep.subr.mxu0 0.0
    %237 = vmatpush1.msra.mxu0 0.0
    %238 = vmatprep.subr.mxu0 0.0
    %239 = vmatpush1.msra.mxu0 0.0
    %240 = vmatprep.subr.mxu0 0.0
    %241 = vmatpush1.msra.mxu0 0.0
    %242 = vmatprep.subr.mxu0 0.0
    %243 = vmatpush1.msra.mxu0 0.0
    %244 = vmatprep.subr.mxu0 0.0
    %245 = vmatpush1.msra.mxu0 0.0
    %246 = vmatprep.subr.mxu0 0.0
    %247 = vmatpush1.msra.mxu0 0.0
    %248 = vmatprep.subr.mxu0 0.0
    %249 = vmatpush1.msra.mxu0 0.0
    %250 = vmatprep.subr.mxu0 0.0
    %251 = vmatpush1.msra.mxu0 0.0
    %252 = vmatprep.subr.mxu0 0.0
    %253 = vmatpush1.msra.mxu0 0.0
    %254 = vmatprep.subr.mxu0 0.0
    %255 = vmatpush1.msra.mxu0 0.0
    %256 = vmatprep.subr.mxu0 0.0
    %257 = vmatpush1.msra.mxu0 0.0
    %258 = vmatprep.subr.mxu0 0.0
    %259 = vmatpush1.msra.mxu0 0.0
    %260 = vmatprep.subr.mxu0 0.0
    %261 = vmatpush1.msra.mxu0 0.0
    %262 = vmatprep.subr.mxu0 0.0
    %263 = vmatpush1.msra.mxu0 %v62
    %264 = vmatprep.subr.mxu0 0.0
    %265 = vmatpush2.msra.mxu0 0.0
    %266 = vmatprep.subr.mxu0 0.0
    %267 = vmatpush2.msra.mxu0 0.0
    %268 = vmatprep.subr.mxu0 0.0
    %269 = vmatpush2.msra.mxu0 0.0
    %270 = vmatprep.subr.mxu0 0.0
    %271 = vmatpush2.msra.mxu0 0.0
    %272 = vmatprep.subr.mxu0 0.0
    %273 = vmatpush2.msra.mxu0 0.0
    %274 = vmatprep.subr.mxu0 0.0
    %275 = vmatpush2.msra.mxu0 0.0
    %276 = vmatprep.subr.mxu0 0.0
    %277 = vmatpush2.msra.mxu0 0.0
    %278 = vmatprep.subr.mxu0 0.0
    %279 = vmatpush2.msra.mxu0 0.0
    %280 = vmatprep.subr.mxu0 0.0
    %281 = vmatpush2.msra.mxu0 0.0
    %282 = vmatprep.subr.mxu0 0.0
    %283 = vmatpush2.msra.mxu0 0.0
    %284 = vmatprep.subr.mxu0 0.0
    %285 = vmatpush2.msra.mxu0 0.0
    %286 = vmatprep.subr.mxu0 0.0
    %287 = vmatpush2.msra.mxu0 0.0
    %288 = vmatprep.subr.mxu0 0.0
    %289 = vmatpush2.msra.mxu0 0.0
    %290 = vmatprep.subr.mxu0 0.0
    %291 = vmatpush2.msra.mxu0 0.0
    %292 = vmatprep.subr.mxu0 0.0
    %293 = vmatpush2.msra.mxu0 0.0
    %294 = vmatprep.subr.mxu0 0.0
    %295 = vmatpush2.msra.mxu0 0.0
    %296 = vmatprep.mubr.f32.mxu0 0.0
    %297 = vmatmul.mubr.f32.gmra.mxu0 %v227
    %v298 = vpop.f32.mrf.mxu0
    %v299 = vadd.f32 0.0, %v298
    %v300 = vpop.f32.mrf.mxu0
    %301 = vmatprep.mubr.f32.mxu0 0.0
    %302 = vmatmul.mubr.f32.gmra.mxu0 %v230
    %v303 = vpop.f32.mrf.mxu0
    %v304 = vadd.f32 0.0, %v303
    %v305 = vpop.f32.mrf.mxu0
    %306 = vdwg.mxu0
    %v308 = vsel %vm63, %v52, 0
    %v311 = vsel %vm63, %v53, 0
    %313 = vmatprep.subr.mxu0 0.0
    %314 = vmatpush1.msra.mxu0 0.0
    %315 = vmatprep.subr.mxu0 0.0
    %316 = vmatpush1.msra.mxu0 0.0
    %317 = vmatprep.subr.mxu0 0.0
    %318 = vmatpush1.msra.mxu0 0.0
    %319 = vmatprep.subr.mxu0 0.0
    %320 = vmatpush1.msra.mxu0 0.0
    %321 = vmatprep.subr.mxu0 0.0
    %322 = vmatpush1.msra.mxu0 0.0
    %323 = vmatprep.subr.mxu0 0.0
    %324 = vmatpush1.msra.mxu0 0.0
    %325 = vmatprep.subr.mxu0 0.0
    %326 = vmatpush1.msra.mxu0 0.0
    %327 = vmatprep.subr.mxu0 0.0
    %328 = vmatpush1.msra.mxu0 0.0
    %329 = vmatprep.subr.mxu0 0.0
    %330 = vmatpush1.msra.mxu0 0.0
    %331 = vmatprep.subr.mxu0 0.0
    %332 = vmatpush1.msra.mxu0 0.0
    %333 = vmatprep.subr.mxu0 0.0
    %334 = vmatpush1.msra.mxu0 0.0
    %335 = vmatprep.subr.mxu0 0.0
    %336 = vmatpush1.msra.mxu0 0.0
    %337 = vmatprep.subr.mxu0 0.0
    %338 = vmatpush1.msra.mxu0 0.0
    %339 = vmatprep.subr.mxu0 0.0
    %340 = vmatpush1.msra.mxu0 0.0
    %341 = vmatprep.subr.mxu0 0.0
    %342 = vmatpush1.msra.mxu0 0.0
    %343 = vmatprep.subr.mxu0 0.0
    %344 = vmatpush1.msra.mxu0 %v62
    %345 = vmatprep.subr.mxu0 0.0
    %346 = vmatpush2.msra.mxu0 0.0
    %347 = vmatprep.subr.mxu0 0.0
    %348 = vmatpush2.msra.mxu0 0.0
    %349 = vmatprep.subr.mxu0 0.0
    %350 = vmatpush2.msra.mxu0 0.0
    %351 = vmatprep.subr.mxu0 0.0
    %352 = vmatpush2.msra.mxu0 0.0
    %353 = vmatprep.subr.mxu0 0.0
    %354 = vmatpush2.msra.mxu0 0.0
    %355 = vmatprep.subr.mxu0 0.0
    %356 = vmatpush2.msra.mxu0 0.0
    %357 = vmatprep.subr.mxu0 0.0
    %358 = vmatpush2.msra.mxu0 0.0
    %359 = vmatprep.subr.mxu0 0.0
    %360 = vmatpush2.msra.mxu0 0.0
    %361 = vmatprep.subr.mxu0 0.0
    %362 = vmatpush2.msra.mxu0 0.0
    %363 = vmatprep.subr.mxu0 0.0
    %364 = vmatpush2.msra.mxu0 0.0
    %365 = vmatprep.subr.mxu0 0.0
    %366 = vmatpush2.msra.mxu0 0.0
    %367 = vmatprep.subr.mxu0 0.0
    %368 = vmatpush2.msra.mxu0 0.0
    %369 = vmatprep.subr.mxu0 0.0
    %370 = vmatpush2.msra.mxu0 0.0
    %371 = vmatprep.subr.mxu0 0.0
    %372 = vmatpush2.msra.mxu0 0.0
    %373 = vmatprep.subr.mxu0 0.0
    %374 = vmatpush2.msra.mxu0 0.0
    %375 = vmatprep.subr.mxu0 0.0
    %376 = vmatpush2.msra.mxu0 0.0
    %377 = vmatprep.mubr.f32.mxu0 0.0
    %378 = vmatmul.mubr.f32.gmra.mxu0 %v308
    %v379 = vpop.f32.mrf.mxu0
    %v380 = vadd.f32 0.0, %v379
    %v381 = vpop.f32.mrf.mxu0
    %382 = vmatprep.mubr.f32.mxu0 0.0
    %383 = vmatmul.mubr.f32.gmra.mxu0 %v311
    %v384 = vpop.f32.mrf.mxu0
    %v385 = vadd.f32 0.0, %v384
    %v386 = vpop.f32.mrf.mxu0
    %387 = vdwg.mxu0
    %v389 = vsel %vm63, %v54, 0
    %v392 = vsel %vm63, %v55, 0
    %394 = vmatprep.subr.mxu0 0.0
    %395 = vmatpush1.msra.mxu0 0.0
    %396 = vmatprep.subr.mxu0 0.0
    %397 = vmatpush1.msra.mxu0 0.0
    %398 = vmatprep.subr.mxu0 0.0
    %399 = vmatpush1.msra.mxu0 0.0
    %400 = vmatprep.subr.mxu0 0.0
    %401 = vmatpush1.msra.mxu0 0.0
    %402 = vmatprep.subr.mxu0 0.0
    %403 = vmatpush1.msra.mxu0 0.0
    %404 = vmatprep.subr.mxu0 0.0
    %405 = vmatpush1.msra.mxu0 0.0
    %406 = vmatprep.subr.mxu0 0.0
    %407 = vmatpush1.msra.mxu0 0.0
    %408 = vmatprep.subr.mxu0 0.0
    %409 = vmatpush1.msra.mxu0 0.0
    %410 = vmatprep.subr.mxu0 0.0
    %411 = vmatpush1.msra.mxu0 0.0
    %412 = vmatprep.subr.mxu0 0.0
    %413 = vmatpush1.msra.mxu0 0.0
    %414 = vmatprep.subr.mxu0 0.0
    %415 = vmatpush1.msra.mxu0 0.0
    %416 = vmatprep.subr.mxu0 0.0
    %417 = vmatpush1.msra.mxu0 0.0
    %418 = vmatprep.subr.mxu0 0.0
    %419 = vmatpush1.msra.mxu0 0.0
    %420 = vmatprep.subr.mxu0 0.0
    %421 = vmatpush1.msra.mxu0 0.0
    %422 = vmatprep.subr.mxu0 0.0
    %423 = vmatpush1.msra.mxu0 0.0
    %424 = vmatprep.subr.mxu0 0.0
    %425 = vmatpush1.msra.mxu0 %v62
    %426 = vmatprep.subr.mxu0 0.0
    %427 = vmatpush2.msra.mxu0 0.0
    %428 = vmatprep.subr.mxu0 0.0
    %429 = vmatpush2.msra.mxu0 0.0
    %430 = vmatprep.subr.mxu0 0.0
    %431 = vmatpush2.msra.mxu0 0.0
    %432 = vmatprep.subr.mxu0 0.0
    %433 = vmatpush2.msra.mxu0 0.0
    %434 = vmatprep.subr.mxu0 0.0
    %435 = vmatpush2.msra.mxu0 0.0
    %436 = vmatprep.subr.mxu0 0.0
    %437 = vmatpush2.msra.mxu0 0.0
    %438 = vmatprep.subr.mxu0 0.0
    %439 = vmatpush2.msra.mxu0 0.0
    %440 = vmatprep.subr.mxu0 0.0
    %441 = vmatpush2.msra.mxu0 0.0
    %442 = vmatprep.subr.mxu0 0.0
    %443 = vmatpush2.msra.mxu0 0.0
    %444 = vmatprep.subr.mxu0 0.0
    %445 = vmatpush2.msra.mxu0 0.0
    %446 = vmatprep.subr.mxu0 0.0
    %447 = vmatpush2.msra.mxu0 0.0
    %448 = vmatprep.subr.mxu0 0.0
    %449 = vmatpush2.msra.mxu0 0.0
    %450 = vmatprep.subr.mxu0 0.0
    %451 = vmatpush2.msra.mxu0 0.0
    %452 = vmatprep.subr.mxu0 0.0
    %453 = vmatpush2.msra.mxu0 0.0
    %454 = vmatprep.subr.mxu0 0.0
    %455 = vmatpush2.msra.mxu0 0.0
    %456 = vmatprep.subr.mxu0 0.0
    %457 = vmatpush2.msra.mxu0 0.0
    %458 = vmatprep.mubr.f32.mxu0 0.0
    %459 = vmatmul.mubr.f32.gmra.mxu0 %v389
    %v460 = vpop.f32.mrf.mxu0
    %v461 = vadd.f32 0.0, %v460
    %v462 = vpop.f32.mrf.mxu0
    %463 = vmatprep.mubr.f32.mxu0 0.0
    %464 = vmatmul.mubr.f32.gmra.mxu0 %v392
    %v465 = vpop.f32.mrf.mxu0
    %v466 = vadd.f32 0.0, %v465
    %v467 = vpop.f32.mrf.mxu0
    %468 = vdwg.mxu0
    %v470 = vsel %vm63, %v56, 0
    %v473 = vsel %vm63, %v57, 0
    %475 = vmatprep.subr.mxu0 0.0
    %476 = vmatpush1.msra.mxu0 0.0
    %477 = vmatprep.subr.mxu0 0.0
    %478 = vmatpush1.msra.mxu0 0.0
    %479 = vmatprep.subr.mxu0 0.0
    %480 = vmatpush1.msra.mxu0 0.0
    %481 = vmatprep.subr.mxu0 0.0
    %482 = vmatpush1.msra.mxu0 0.0
    %483 = vmatprep.subr.mxu0 0.0
    %484 = vmatpush1.msra.mxu0 0.0
    %485 = vmatprep.subr.mxu0 0.0
    %486 = vmatpush1.msra.mxu0 0.0
    %487 = vmatprep.subr.mxu0 0.0
    %488 = vmatpush1.msra.mxu0 0.0
    %489 = vmatprep.subr.mxu0 0.0
    %490 = vmatpush1.msra.mxu0 0.0
    %491 = vmatprep.subr.mxu0 0.0
    %492 = vmatpush1.msra.mxu0 0.0
    %493 = vmatprep.subr.mxu0 0.0
    %494 = vmatpush1.msra.mxu0 0.0
    %495 = vmatprep.subr.mxu0 0.0
    %496 = vmatpush1.msra.mxu0 0.0
    %497 = vmatprep.subr.mxu0 0.0
    %498 = vmatpush1.msra.mxu0 0.0
    %499 = vmatprep.subr.mxu0 0.0
    %500 = vmatpush1.msra.mxu0 0.0
    %501 = vmatprep.subr.mxu0 0.0
    %502 = vmatpush1.msra.mxu0 0.0
    %503 = vmatprep.subr.mxu0 0.0
    %504 = vmatpush1.msra.mxu0 0.0
    %505 = vmatprep.subr.mxu0 0.0
    %506 = vmatpush1.msra.mxu0 %v62
    %507 = vmatprep.subr.mxu0 0.0
    %508 = vmatpush2.msra.mxu0 0.0
    %509 = vmatprep.subr.mxu0 0.0
    %510 = vmatpush2.msra.mxu0 0.0
    %511 = vmatprep.subr.mxu0 0.0
    %512 = vmatpush2.msra.mxu0 0.0
    %513 = vmatprep.subr.mxu0 0.0
    %514 = vmatpush2.msra.mxu0 0.0
    %515 = vmatprep.subr.mxu0 0.0
    %516 = vmatpush2.msra.mxu0 0.0
    %517 = vmatprep.subr.mxu0 0.0
    %518 = vmatpush2.msra.mxu0 0.0
    %519 = vmatprep.subr.mxu0 0.0
    %520 = vmatpush2.msra.mxu0 0.0
    %521 = vmatprep.subr.mxu0 0.0
    %522 = vmatpush2.msra.mxu0 0.0
    %523 = vmatprep.subr.mxu0 0.0
    %524 = vmatpush2.msra.mxu0 0.0
    %525 = vmatprep.subr.mxu0 0.0
    %526 = vmatpush2.msra.mxu0 0.0
    %527 = vmatprep.subr.mxu0 0.0
    %528 = vmatpush2.msra.mxu0 0.0
    %529 = vmatprep.subr.mxu0 0.0
    %530 = vmatpush2.msra.mxu0 0.0
    %531 = vmatprep.subr.mxu0 0.0
    %532 = vmatpush2.msra.mxu0 0.0
    %533 = vmatprep.subr.mxu0 0.0
    %534 = vmatpush2.msra.mxu0 0.0
    %535 = vmatprep.subr.mxu0 0.0
    %536 = vmatpush2.msra.mxu0 0.0
    %537 = vmatprep.subr.mxu0 0.0
    %538 = vmatpush2.msra.mxu0 0.0
    %539 = vmatprep.mubr.f32.mxu0 0.0
    %540 = vmatmul.mubr.f32.gmra.mxu0 %v470
    %v541 = vpop.f32.mrf.mxu0
    %v542 = vadd.f32 0.0, %v541
    %v543 = vpop.f32.mrf.mxu0
    %544 = vmatprep.mubr.f32.mxu0 0.0
    %545 = vmatmul.mubr.f32.gmra.mxu0 %v473
    %v546 = vpop.f32.mrf.mxu0
    %v547 = vadd.f32 0.0, %v546
    %v548 = vpop.f32.mrf.mxu0
    %549 = vdwg.mxu0
    %v551 = vsel %vm63, %v58, 0
    %v554 = vsel %vm63, %v59, 0
    %556 = vmatprep.subr.mxu0 0.0
    %557 = vmatpush1.msra.mxu0 0.0
    %558 = vmatprep.subr.mxu0 0.0
    %559 = vmatpush1.msra.mxu0 0.0
    %560 = vmatprep.subr.mxu0 0.0
    %561 = vmatpush1.msra.mxu0 0.0
    %562 = vmatprep.subr.mxu0 0.0
    %563 = vmatpush1.msra.mxu0 0.0
    %564 = vmatprep.subr.mxu0 0.0
    %565 = vmatpush1.msra.mxu0 0.0
    %566 = vmatprep.subr.mxu0 0.0
    %567 = vmatpush1.msra.mxu0 0.0
    %568 = vmatprep.subr.mxu0 0.0
    %569 = vmatpush1.msra.mxu0 0.0
    %570 = vmatprep.subr.mxu0 0.0
    %571 = vmatpush1.msra.mxu0 0.0
    %572 = vmatprep.subr.mxu0 0.0
    %573 = vmatpush1.msra.mxu0 0.0
    %574 = vmatprep.subr.mxu0 0.0
    %575 = vmatpush1.msra.mxu0 0.0
    %576 = vmatprep.subr.mxu0 0.0
    %577 = vmatpush1.msra.mxu0 0.0
    %578 = vmatprep.subr.mxu0 0.0
    %579 = vmatpush1.msra.mxu0 0.0
    %580 = vmatprep.subr.mxu0 0.0
    %581 = vmatpush1.msra.mxu0 0.0
    %582 = vmatprep.subr.mxu0 0.0
    %583 = vmatpush1.msra.mxu0 0.0
    %584 = vmatprep.subr.mxu0 0.0
    %585 = vmatpush1.msra.mxu0 0.0
    %586 = vmatprep.subr.mxu0 0.0
    %587 = vmatpush1.msra.mxu0 %v62
    %588 = vmatprep.subr.mxu0 0.0
    %589 = vmatpush2.msra.mxu0 0.0
    %590 = vmatprep.subr.mxu0 0.0
    %591 = vmatpush2.msra.mxu0 0.0
    %592 = vmatprep.subr.mxu0 0.0
    %593 = vmatpush2.msra.mxu0 0.0
    %594 = vmatprep.subr.mxu0 0.0
    %595 = vmatpush2.msra.mxu0 0.0
    %596 = vmatprep.subr.mxu0 0.0
    %597 = vmatpush2.msra.mxu0 0.0
    %598 = vmatprep.subr.mxu0 0.0
    %599 = vmatpush2.msra.mxu0 0.0
    %600 = vmatprep.subr.mxu0 0.0
    %601 = vmatpush2.msra.mxu0 0.0
    %602 = vmatprep.subr.mxu0 0.0
    %603 = vmatpush2.msra.mxu0 0.0
    %604 = vmatprep.subr.mxu0 0.0
    %605 = vmatpush2.msra.mxu0 0.0
    %606 = vmatprep.subr.mxu0 0.0
    %607 = vmatpush2.msra.mxu0 0.0
    %608 = vmatprep.subr.mxu0 0.0
    %609 = vmatpush2.msra.mxu0 0.0
    %610 = vmatprep.subr.mxu0 0.0
    %611 = vmatpush2.msra.mxu0 0.0
    %612 = vmatprep.subr.mxu0 0.0
    %613 = vmatpush2.msra.mxu0 0.0
    %614 = vmatprep.subr.mxu0 0.0
    %615 = vmatpush2.msra.mxu0 0.0
    %616 = vmatprep.subr.mxu0 0.0
    %617 = vmatpush2.msra.mxu0 0.0
    %618 = vmatprep.subr.mxu0 0.0
    %619 = vmatpush2.msra.mxu0 0.0
    %620 = vmatprep.mubr.f32.mxu0 0.0
    %621 = vmatmul.mubr.f32.gmra.mxu0 %v551
    %v622 = vpop.f32.mrf.mxu0
    %v623 = vadd.f32 0.0, %v622
    %v624 = vpop.f32.mrf.mxu0
    %625 = vmatprep.mubr.f32.mxu0 0.0
    %626 = vmatmul.mubr.f32.gmra.mxu0 %v554
    %v627 = vpop.f32.mrf.mxu0
    %v628 = vadd.f32 0.0, %v627
    %v629 = vpop.f32.mrf.mxu0
    %630 = vdwg.mxu0
    %v632 = vsel %vm63, %v60, 0
    %v635 = vsel %vm63, %v61, 0
    %637 = vmatprep.subr.mxu0 0.0
    %638 = vmatpush1.msra.mxu0 0.0
    %639 = vmatprep.subr.mxu0 0.0
    %640 = vmatpush1.msra.mxu0 0.0
    %641 = vmatprep.subr.mxu0 0.0
    %642 = vmatpush1.msra.mxu0 0.0
    %643 = vmatprep.subr.mxu0 0.0
    %644 = vmatpush1.msra.mxu0 0.0
    %645 = vmatprep.subr.mxu0 0.0
    %646 = vmatpush1.msra.mxu0 0.0
    %647 = vmatprep.subr.mxu0 0.0
    %648 = vmatpush1.msra.mxu0 0.0
    %649 = vmatprep.subr.mxu0 0.0
    %650 = vmatpush1.msra.mxu0 0.0
    %651 = vmatprep.subr.mxu0 0.0
    %652 = vmatpush1.msra.mxu0 0.0
    %653 = vmatprep.subr.mxu0 0.0
    %654 = vmatpush1.msra.mxu0 0.0
    %655 = vmatprep.subr.mxu0 0.0
    %656 = vmatpush1.msra.mxu0 0.0
    %657 = vmatprep.subr.mxu0 0.0
    %658 = vmatpush1.msra.mxu0 0.0
    %659 = vmatprep.subr.mxu0 0.0
    %660 = vmatpush1.msra.mxu0 0.0
    %661 = vmatprep.subr.mxu0 0.0
    %662 = vmatpush1.msra.mxu0 0.0
    %663 = vmatprep.subr.mxu0 0.0
    %664 = vmatpush1.msra.mxu0 0.0
    %665 = vmatprep.subr.mxu0 0.0
    %666 = vmatpush1.msra.mxu0 0.0
    %667 = vmatprep.subr.mxu0 0.0
    %668 = vmatpush1.msra.mxu0 %v62
    %669 = vmatprep.subr.mxu0 0.0
    %670 = vmatpush2.msra.mxu0 0.0
    %671 = vmatprep.subr.mxu0 0.0
    %672 = vmatpush2.msra.mxu0 0.0
    %673 = vmatprep.subr.mxu0 0.0
    %674 = vmatpush2.msra.mxu0 0.0
    %675 = vmatprep.subr.mxu0 0.0
    %676 = vmatpush2.msra.mxu0 0.0
    %677 = vmatprep.subr.mxu0 0.0
    %678 = vmatpush2.msra.mxu0 0.0
    %679 = vmatprep.subr.mxu0 0.0
    %680 = vmatpush2.msra.mxu0 0.0
    %681 = vmatprep.subr.mxu0 0.0
    %682 = vmatpush2.msra.mxu0 0.0
    %683 = vmatprep.subr.mxu0 0.0
    %684 = vmatpush2.msra.mxu0 0.0
    %685 = vmatprep.subr.mxu0 0.0
    %686 = vmatpush2.msra.mxu0 0.0
    %687 = vmatprep.subr.mxu0 0.0
    %688 = vmatpush2.msra.mxu0 0.0
    %689 = vmatprep.subr.mxu0 0.0
    %690 = vmatpush2.msra.mxu0 0.0
    %691 = vmatprep.subr.mxu0 0.0
    %692 = vmatpush2.msra.mxu0 0.0
    %693 = vmatprep.subr.mxu0 0.0
    %694 = vmatpush2.msra.mxu0 0.0
    %695 = vmatprep.subr.mxu0 0.0
    %696 = vmatpush2.msra.mxu0 0.0
    %697 = vmatprep.subr.mxu0 0.0
    %698 = vmatpush2.msra.mxu0 0.0
    %699 = vmatprep.subr.mxu0 0.0
    %700 = vmatpush2.msra.mxu0 0.0
    %701 = vmatprep.mubr.f32.mxu0 0.0
    %702 = vmatmul.mubr.f32.gmra.mxu0 %v632
    %v703 = vpop.f32.mrf.mxu0
    %v704 = vadd.f32 0.0, %v703
    %v705 = vpop.f32.mrf.mxu0
    %706 = vmatprep.mubr.f32.mxu0 0.0
    %707 = vmatmul.mubr.f32.gmra.mxu0 %v635
    %v708 = vpop.f32.mrf.mxu0
    %v709 = vadd.f32 0.0, %v708
    %v710 = vpop.f32.mrf.mxu0
    %711 = vdwg.mxu0
    %v712 = vld [vmem:[#allocation2 + $0x1] sm:$0xff]
    %v713 = vld [vmem:[#allocation2 + $0x9] sm:$0xff]
    %v714 = vld [vmem:[#allocation2 + $0x19] sm:$0xff]
    %v715 = vld [vmem:[#allocation2 + $0x21] sm:$0xff]
    %v716 = vld [vmem:[#allocation2 + $0x31] sm:$0xff]
    %v717 = vld [vmem:[#allocation2 + $0x39] sm:$0xff]
    %v718 = vld [vmem:[#allocation2 + $0x49] sm:$0xff]
    %v719 = vld [vmem:[#allocation2 + $0x51] sm:$0xff]
    %v720 = vld [vmem:[#allocation2 + $0x61] sm:$0xff]
    %v721 = vld [vmem:[#allocation2 + $0x69] sm:$0xff]
    %v722 = vld [vmem:[#allocation2 + $0x79] sm:$0xff]
    %v723 = vld [vmem:[#allocation2 + $0x81] sm:$0xff]
    %v724 = vld [vmem:[#allocation2 + $0x91] sm:$0xff]
    %v725 = vld [vmem:[#allocation2 + $0x99] sm:$0xff]
    %v726 = vld [vmem:[#allocation2 + $0xa9] sm:$0xff]
    %v727 = vld [vmem:[#allocation2 + $0xb1] sm:$0xff]
    %v728 = vadd.f32 %v712, %v137
    %v729 = vadd.f32 %v713, %v142
    %v730 = vadd.f32 %v714, %v218
    %v731 = vadd.f32 %v715, %v223
    %v732 = vadd.f32 %v716, %v299
    %v733 = vadd.f32 %v717, %v304
    %v734 = vadd.f32 %v718, %v380
    %v735 = vadd.f32 %v719, %v385
    %v736 = vadd.f32 %v720, %v461
    %v737 = vadd.f32 %v721, %v466
    %v738 = vadd.f32 %v722, %v542
    %v739 = vadd.f32 %v723, %v547
    %v740 = vadd.f32 %v724, %v623
    %v741 = vadd.f32 %v725, %v628
    %v742 = vadd.f32 %v726, %v704
    %v743 = vadd.f32 %v727, %v709
    %744 = vst [vmem:[#allocation2 + $0x1] sm:$0xff] %v728
    %745 = vst [vmem:[#allocation2 + $0x9] sm:$0xff] %v729
    %746 = vst [vmem:[#allocation2 + $0x19] sm:$0xff] %v730
    %747 = vst [vmem:[#allocation2 + $0x21] sm:$0xff] %v731
    %748 = vst [vmem:[#allocation2 + $0x31] sm:$0xff] %v732
    %749 = vst [vmem:[#allocation2 + $0x39] sm:$0xff] %v733
    %750 = vst [vmem:[#allocation2 + $0x49] sm:$0xff] %v734
    %751 = vst [vmem:[#allocation2 + $0x51] sm:$0xff] %v735
    %752 = vst [vmem:[#allocation2 + $0x61] sm:$0xff] %v736
    %753 = vst [vmem:[#allocation2 + $0x69] sm:$0xff] %v737
    %754 = vst [vmem:[#allocation2 + $0x79] sm:$0xff] %v738
    %755 = vst [vmem:[#allocation2 + $0x81] sm:$0xff] %v739
    %756 = vst [vmem:[#allocation2 + $0x91] sm:$0xff] %v740
    %757 = vst [vmem:[#allocation2 + $0x99] sm:$0xff] %v741
    %758 = vst [vmem:[#allocation2 + $0xa9] sm:$0xff] %v742
    %759 = vst [vmem:[#allocation2 + $0xb1] sm:$0xff] %v743
    %s760 = scalar_lea.vmem %s1, 8
    %v761 = vld [vmem:[%s760] sm:$0xff]
    %762 = vmatprep.subr.mxu0 0.0
    %763 = vmatpush1.msra.mxu0 0.0
    %764 = vmatprep.subr.mxu0 0.0
    %765 = vmatpush1.msra.mxu0 0.0
    %766 = vmatprep.subr.mxu0 0.0
    %767 = vmatpush1.msra.mxu0 0.0
    %768 = vmatprep.subr.mxu0 0.0
    %769 = vmatpush1.msra.mxu0 0.0
    %770 = vmatprep.subr.mxu0 0.0
    %771 = vmatpush1.msra.mxu0 0.0
    %772 = vmatprep.subr.mxu0 0.0
    %773 = vmatpush1.msra.mxu0 0.0
    %774 = vmatprep.subr.mxu0 0.0
    %775 = vmatpush1.msra.mxu0 0.0
    %776 = vmatprep.subr.mxu0 0.0
    %777 = vmatpush1.msra.mxu0 0.0
    %778 = vmatprep.subr.mxu0 0.0
    %779 = vmatpush1.msra.mxu0 0.0
    %780 = vmatprep.subr.mxu0 0.0
    %781 = vmatpush1.msra.mxu0 0.0
    %782 = vmatprep.subr.mxu0 0.0
    %783 = vmatpush1.msra.mxu0 0.0
    %784 = vmatprep.subr.mxu0 0.0
    %785 = vmatpush1.msra.mxu0 0.0
    %786 = vmatprep.subr.mxu0 0.0
    %787 = vmatpush1.msra.mxu0 0.0
    %788 = vmatprep.subr.mxu0 0.0
    %789 = vmatpush1.msra.mxu0 0.0
    %790 = vmatprep.subr.mxu0 0.0
    %791 = vmatpush1.msra.mxu0 0.0
    %792 = vmatprep.subr.mxu0 0.0
    %793 = vmatpush1.msra.mxu0 %v761
    %794 = vmatprep.subr.mxu0 0.0
    %795 = vmatpush2.msra.mxu0 0.0
    %796 = vmatprep.subr.mxu0 0.0
    %797 = vmatpush2.msra.mxu0 0.0
    %798 = vmatprep.subr.mxu0 0.0
    %799 = vmatpush2.msra.mxu0 0.0
    %800 = vmatprep.subr.mxu0 0.0
    %801 = vmatpush2.msra.mxu0 0.0
    %802 = vmatprep.subr.mxu0 0.0
    %803 = vmatpush2.msra.mxu0 0.0
    %804 = vmatprep.subr.mxu0 0.0
    %805 = vmatpush2.msra.mxu0 0.0
    %806 = vmatprep.subr.mxu0 0.0
    %807 = vmatpush2.msra.mxu0 0.0
    %808 = vmatprep.subr.mxu0 0.0
    %809 = vmatpush2.msra.mxu0 0.0
    %810 = vmatprep.subr.mxu0 0.0
    %811 = vmatpush2.msra.mxu0 0.0
    %812 = vmatprep.subr.mxu0 0.0
    %813 = vmatpush2.msra.mxu0 0.0
    %814 = vmatprep.subr.mxu0 0.0
    %815 = vmatpush2.msra.mxu0 0.0
    %816 = vmatprep.subr.mxu0 0.0
    %817 = vmatpush2.msra.mxu0 0.0
    %818 = vmatprep.subr.mxu0 0.0
    %819 = vmatpush2.msra.mxu0 0.0
    %820 = vmatprep.subr.mxu0 0.0
    %821 = vmatpush2.msra.mxu0 0.0
    %822 = vmatprep.subr.mxu0 0.0
    %823 = vmatpush2.msra.mxu0 0.0
    %824 = vmatprep.subr.mxu0 0.0
    %825 = vmatpush2.msra.mxu0 0.0
    %826 = vmatprep.mubr.f32.mxu0 0.0
    %827 = vmatmul.mubr.f32.gmra.mxu0 %v65
    %v828 = vpop.f32.mrf.mxu0
    %v829 = vadd.f32 0.0, %v828
    %v830 = vpop.f32.mrf.mxu0
    %831 = vmatprep.mubr.f32.mxu0 0.0
    %832 = vmatmul.mubr.f32.gmra.mxu0 %v68
    %v833 = vpop.f32.mrf.mxu0
    %v834 = vadd.f32 0.0, %v833
    %v835 = vpop.f32.mrf.mxu0
    %836 = vdwg.mxu0
    %837 = vmatprep.subr.mxu0 0.0
    %838 = vmatpush1.msra.mxu0 0.0
    %839 = vmatprep.subr.mxu0 0.0
    %840 = vmatpush1.msra.mxu0 0.0
    %841 = vmatprep.subr.mxu0 0.0
    %842 = vmatpush1.msra.mxu0 0.0
    %843 = vmatprep.subr.mxu0 0.0
    %844 = vmatpush1.msra.mxu0 0.0
    %845 = vmatprep.subr.mxu0 0.0
    %846 = vmatpush1.msra.mxu0 0.0
    %847 = vmatprep.subr.mxu0 0.0
    %848 = vmatpush1.msra.mxu0 0.0
    %849 = vmatprep.subr.mxu0 0.0
    %850 = vmatpush1.msra.mxu0 0.0
    %851 = vmatprep.subr.mxu0 0.0
    %852 = vmatpush1.msra.mxu0 0.0
    %853 = vmatprep.subr.mxu0 0.0
    %854 = vmatpush1.msra.mxu0 0.0
    %855 = vmatprep.subr.mxu0 0.0
    %856 = vmatpush1.msra.mxu0 0.0
    %857 = vmatprep.subr.mxu0 0.0
    %858 = vmatpush1.msra.mxu0 0.0
    %859 = vmatprep.subr.mxu0 0.0
    %860 = vmatpush1.msra.mxu0 0.0
    %861 = vmatprep.subr.mxu0 0.0
    %862 = vmatpush1.msra.mxu0 0.0
    %863 = vmatprep.subr.mxu0 0.0
    %864 = vmatpush1.msra.mxu0 0.0
    %865 = vmatprep.subr.mxu0 0.0
    %866 = vmatpush1.msra.mxu0 0.0
    %867 = vmatprep.subr.mxu0 0.0
    %868 = vmatpush1.msra.mxu0 %v761
    %869 = vmatprep.subr.mxu0 0.0
    %870 = vmatpush2.msra.mxu0 0.0
    %871 = vmatprep.subr.mxu0 0.0
    %872 = vmatpush2.msra.mxu0 0.0
    %873 = vmatprep.subr.mxu0 0.0
    %874 = vmatpush2.msra.mxu0 0.0
    %875 = vmatprep.subr.mxu0 0.0
    %876 = vmatpush2.msra.mxu0 0.0
    %877 = vmatprep.subr.mxu0 0.0
    %878 = vmatpush2.msra.mxu0 0.0
    %879 = vmatprep.subr.mxu0 0.0
    %880 = vmatpush2.msra.mxu0 0.0
    %881 = vmatprep.subr.mxu0 0.0
    %882 = vmatpush2.msra.mxu0 0.0
    %883 = vmatprep.subr.mxu0 0.0
    %884 = vmatpush2.msra.mxu0 0.0
    %885 = vmatprep.subr.mxu0 0.0
    %886 = vmatpush2.msra.mxu0 0.0
    %887 = vmatprep.subr.mxu0 0.0
    %888 = vmatpush2.msra.mxu0 0.0
    %889 = vmatprep.subr.mxu0 0.0
    %890 = vmatpush2.msra.mxu0 0.0
    %891 = vmatprep.subr.mxu0 0.0
    %892 = vmatpush2.msra.mxu0 0.0
    %893 = vmatprep.subr.mxu0 0.0
    %894 = vmatpush2.msra.mxu0 0.0
    %895 = vmatprep.subr.mxu0 0.0
    %896 = vmatpush2.msra.mxu0 0.0
    %897 = vmatprep.subr.mxu0 0.0
    %898 = vmatpush2.msra.mxu0 0.0
    %899 = vmatprep.subr.mxu0 0.0
    %900 = vmatpush2.msra.mxu0 0.0
    %901 = vmatprep.mubr.f32.mxu0 0.0
    %902 = vmatmul.mubr.f32.gmra.mxu0 %v146
    %v903 = vpop.f32.mrf.mxu0
    %v904 = vadd.f32 0.0, %v903
    %v905 = vpop.f32.mrf.mxu0
    %906 = vmatprep.mubr.f32.mxu0 0.0
    %907 = vmatmul.mubr.f32.gmra.mxu0 %v149
    %v908 = vpop.f32.mrf.mxu0
    %v909 = vadd.f32 0.0, %v908
    %v910 = vpop.f32.mrf.mxu0
    %911 = vdwg.mxu0
    %912 = vmatprep.subr.mxu0 0.0
    %913 = vmatpush1.msra.mxu0 0.0
    %914 = vmatprep.subr.mxu0 0.0
    %915 = vmatpush1.msra.mxu0 0.0
    %916 = vmatprep.subr.mxu0 0.0
    %917 = vmatpush1.msra.mxu0 0.0
    %918 = vmatprep.subr.mxu0 0.0
    %919 = vmatpush1.msra.mxu0 0.0
    %920 = vmatprep.subr.mxu0 0.0
    %921 = vmatpush1.msra.mxu0 0.0
    %922 = vmatprep.subr.mxu0 0.0
    %923 = vmatpush1.msra.mxu0 0.0
    %924 = vmatprep.subr.mxu0 0.0
    %925 = vmatpush1.msra.mxu0 0.0
    %926 = vmatprep.subr.mxu0 0.0
    %927 = vmatpush1.msra.mxu0 0.0
    %928 = vmatprep.subr.mxu0 0.0
    %929 = vmatpush1.msra.mxu0 0.0
    %930 = vmatprep.subr.mxu0 0.0
    %931 = vmatpush1.msra.mxu0 0.0
    %932 = vmatprep.subr.mxu0 0.0
    %933 = vmatpush1.msra.mxu0 0.0
    %934 = vmatprep.subr.mxu0 0.0
    %935 = vmatpush1.msra.mxu0 0.0
    %936 = vmatprep.subr.mxu0 0.0
    %937 = vmatpush1.msra.mxu0 0.0
    %938 = vmatprep.subr.mxu0 0.0
    %939 = vmatpush1.msra.mxu0 0.0
    %940 = vmatprep.subr.mxu0 0.0
    %941 = vmatpush1.msra.mxu0 0.0
    %942 = vmatprep.subr.mxu0 0.0
    %943 = vmatpush1.msra.mxu0 %v761
    %944 = vmatprep.subr.mxu0 0.0
    %945 = vmatpush2.msra.mxu0 0.0
    %946 = vmatprep.subr.mxu0 0.0
    %947 = vmatpush2.msra.mxu0 0.0
    %948 = vmatprep.subr.mxu0 0.0
    %949 = vmatpush2.msra.mxu0 0.0
    %950 = vmatprep.subr.mxu0 0.0
    %951 = vmatpush2.msra.mxu0 0.0
    %952 = vmatprep.subr.mxu0 0.0
    %953 = vmatpush2.msra.mxu0 0.0
    %954 = vmatprep.subr.mxu0 0.0
    %955 = vmatpush2.msra.mxu0 0.0
    %956 = vmatprep.subr.mxu0 0.0
    %957 = vmatpush2.msra.mxu0 0.0
    %958 = vmatprep.subr.mxu0 0.0
    %959 = vmatpush2.msra.mxu0 0.0
    %960 = vmatprep.subr.mxu0 0.0
    %961 = vmatpush2.msra.mxu0 0.0
    %962 = vmatprep.subr.mxu0 0.0
    %963 = vmatpush2.msra.mxu0 0.0
    %964 = vmatprep.subr.mxu0 0.0
    %965 = vmatpush2.msra.mxu0 0.0
    %966 = vmatprep.subr.mxu0 0.0
    %967 = vmatpush2.msra.mxu0 0.0
    %968 = vmatprep.subr.mxu0 0.0
    %969 = vmatpush2.msra.mxu0 0.0
    %970 = vmatprep.subr.mxu0 0.0
    %971 = vmatpush2.msra.mxu0 0.0
    %972 = vmatprep.subr.mxu0 0.0
    %973 = vmatpush2.msra.mxu0 0.0
    %974 = vmatprep.subr.mxu0 0.0
    %975 = vmatpush2.msra.mxu0 0.0
    %976 = vmatprep.mubr.f32.mxu0 0.0
    %977 = vmatmul.mubr.f32.gmra.mxu0 %v227
    %v978 = vpop.f32.mrf.mxu0
    %v979 = vadd.f32 0.0, %v978
    %v980 = vpop.f32.mrf.mxu0
    %981 = vmatprep.mubr.f32.mxu0 0.0
    %982 = vmatmul.mubr.f32.gmra.mxu0 %v230
    %v983 = vpop.f32.mrf.mxu0
    %v984 = vadd.f32 0.0, %v983
    %v985 = vpop.f32.mrf.mxu0
    %986 = vdwg.mxu0
    %987 = vmatprep.subr.mxu0 0.0
    %988 = vmatpush1.msra.mxu0 0.0
    %989 = vmatprep.subr.mxu0 0.0
    %990 = vmatpush1.msra.mxu0 0.0
    %991 = vmatprep.subr.mxu0 0.0
    %992 = vmatpush1.msra.mxu0 0.0
    %993 = vmatprep.subr.mxu0 0.0
    %994 = vmatpush1.msra.mxu0 0.0
    %995 = vmatprep.subr.mxu0 0.0
    %996 = vmatpush1.msra.mxu0 0.0
    %997 = vmatprep.subr.mxu0 0.0
    %998 = vmatpush1.msra.mxu0 0.0
    %999 = vmatprep.subr.mxu0 0.0
    %1000 = vmatpush1.msra.mxu0 0.0
    %1001 = vmatprep.subr.mxu0 0.0
    %1002 = vmatpush1.msra.mxu0 0.0
    %1003 = vmatprep.subr.mxu0 0.0
    %1004 = vmatpush1.msra.mxu0 0.0
    %1005 = vmatprep.subr.mxu0 0.0
    %1006 = vmatpush1.msra.mxu0 0.0
    %1007 = vmatprep.subr.mxu0 0.0
    %1008 = vmatpush1.msra.mxu0 0.0
    %1009 = vmatprep.subr.mxu0 0.0
    %1010 = vmatpush1.msra.mxu0 0.0
    %1011 = vmatprep.subr.mxu0 0.0
    %1012 = vmatpush1.msra.mxu0 0.0
    %1013 = vmatprep.subr.mxu0 0.0
    %1014 = vmatpush1.msra.mxu0 0.0
    %1015 = vmatprep.subr.mxu0 0.0
    %1016 = vmatpush1.msra.mxu0 0.0
    %1017 = vmatprep.subr.mxu0 0.0
    %1018 = vmatpush1.msra.mxu0 %v761
    %1019 = vmatprep.subr.mxu0 0.0
    %1020 = vmatpush2.msra.mxu0 0.0
    %1021 = vmatprep.subr.mxu0 0.0
    %1022 = vmatpush2.msra.mxu0 0.0
    %1023 = vmatprep.subr.mxu0 0.0
    %1024 = vmatpush2.msra.mxu0 0.0
    %1025 = vmatprep.subr.mxu0 0.0
    %1026 = vmatpush2.msra.mxu0 0.0
    %1027 = vmatprep.subr.mxu0 0.0
    %1028 = vmatpush2.msra.mxu0 0.0
    %1029 = vmatprep.subr.mxu0 0.0
    %1030 = vmatpush2.msra.mxu0 0.0
    %1031 = vmatprep.subr.mxu0 0.0
    %1032 = vmatpush2.msra.mxu0 0.0
    %1033 = vmatprep.subr.mxu0 0.0
    %1034 = vmatpush2.msra.mxu0 0.0
    %1035 = vmatprep.subr.mxu0 0.0
    %1036 = vmatpush2.msra.mxu0 0.0
    %1037 = vmatprep.subr.mxu0 0.0
    %1038 = vmatpush2.msra.mxu0 0.0
    %1039 = vmatprep.subr.mxu0 0.0
    %1040 = vmatpush2.msra.mxu0 0.0
    %1041 = vmatprep.subr.mxu0 0.0
    %1042 = vmatpush2.msra.mxu0 0.0
    %1043 = vmatprep.subr.mxu0 0.0
    %1044 = vmatpush2.msra.mxu0 0.0
    %1045 = vmatprep.subr.mxu0 0.0
    %1046 = vmatpush2.msra.mxu0 0.0
    %1047 = vmatprep.subr.mxu0 0.0
    %1048 = vmatpush2.msra.mxu0 0.0
    %1049 = vmatprep.subr.mxu0 0.0
    %1050 = vmatpush2.msra.mxu0 0.0
    %1051 = vmatprep.mubr.f32.mxu0 0.0
    %1052 = vmatmul.mubr.f32.gmra.mxu0 %v308
    %v1053 = vpop.f32.mrf.mxu0
    %v1054 = vadd.f32 0.0, %v1053
    %v1055 = vpop.f32.mrf.mxu0
    %1056 = vmatprep.mubr.f32.mxu0 0.0
    %1057 = vmatmul.mubr.f32.gmra.mxu0 %v311
    %v1058 = vpop.f32.mrf.mxu0
    %v1059 = vadd.f32 0.0, %v1058
    %v1060 = vpop.f32.mrf.mxu0
    %1061 = vdwg.mxu0
    %1062 = vmatprep.subr.mxu0 0.0
    %1063 = vmatpush1.msra.mxu0 0.0
    %1064 = vmatprep.subr.mxu0 0.0
    %1065 = vmatpush1.msra.mxu0 0.0
    %1066 = vmatprep.subr.mxu0 0.0
    %1067 = vmatpush1.msra.mxu0 0.0
    %1068 = vmatprep.subr.mxu0 0.0
    %1069 = vmatpush1.msra.mxu0 0.0
    %1070 = vmatprep.subr.mxu0 0.0
    %1071 = vmatpush1.msra.mxu0 0.0
    %1072 = vmatprep.subr.mxu0 0.0
    %1073 = vmatpush1.msra.mxu0 0.0
    %1074 = vmatprep.subr.mxu0 0.0
    %1075 = vmatpush1.msra.mxu0 0.0
    %1076 = vmatprep.subr.mxu0 0.0
    %1077 = vmatpush1.msra.mxu0 0.0
    %1078 = vmatprep.subr.mxu0 0.0
    %1079 = vmatpush1.msra.mxu0 0.0
    %1080 = vmatprep.subr.mxu0 0.0
    %1081 = vmatpush1.msra.mxu0 0.0
    %1082 = vmatprep.subr.mxu0 0.0
    %1083 = vmatpush1.msra.mxu0 0.0
    %1084 = vmatprep.subr.mxu0 0.0
    %1085 = vmatpush1.msra.mxu0 0.0
    %1086 = vmatprep.subr.mxu0 0.0
    %1087 = vmatpush1.msra.mxu0 0.0
    %1088 = vmatprep.subr.mxu0 0.0
    %1089 = vmatpush1.msra.mxu0 0.0
    %1090 = vmatprep.subr.mxu0 0.0
    %1091 = vmatpush1.msra.mxu0 0.0
    %1092 = vmatprep.subr.mxu0 0.0
    %1093 = vmatpush1.msra.mxu0 %v761
    %1094 = vmatprep.subr.mxu0 0.0
    %1095 = vmatpush2.msra.mxu0 0.0
    %1096 = vmatprep.subr.mxu0 0.0
    %1097 = vmatpush2.msra.mxu0 0.0
    %1098 = vmatprep.subr.mxu0 0.0
    %1099 = vmatpush2.msra.mxu0 0.0
    %1100 = vmatprep.subr.mxu0 0.0
    %1101 = vmatpush2.msra.mxu0 0.0
    %1102 = vmatprep.subr.mxu0 0.0
    %1103 = vmatpush2.msra.mxu0 0.0
    %1104 = vmatprep.subr.mxu0 0.0
    %1105 = vmatpush2.msra.mxu0 0.0
    %1106 = vmatprep.subr.mxu0 0.0
    %1107 = vmatpush2.msra.mxu0 0.0
    %1108 = vmatprep.subr.mxu0 0.0
    %1109 = vmatpush2.msra.mxu0 0.0
    %1110 = vmatprep.subr.mxu0 0.0
    %1111 = vmatpush2.msra.mxu0 0.0
    %1112 = vmatprep.subr.mxu0 0.0
    %1113 = vmatpush2.msra.mxu0 0.0
    %1114 = vmatprep.subr.mxu0 0.0
    %1115 = vmatpush2.msra.mxu0 0.0
    %1116 = vmatprep.subr.mxu0 0.0
    %1117 = vmatpush2.msra.mxu0 0.0
    %1118 = vmatprep.subr.mxu0 0.0
    %1119 = vmatpush2.msra.mxu0 0.0
    %1120 = vmatprep.subr.mxu0 0.0
    %1121 = vmatpush2.msra.mxu0 0.0
    %1122 = vmatprep.subr.mxu0 0.0
    %1123 = vmatpush2.msra.mxu0 0.0
    %1124 = vmatprep.subr.mxu0 0.0
    %1125 = vmatpush2.msra.mxu0 0.0
    %1126 = vmatprep.mubr.f32.mxu0 0.0
    %1127 = vmatmul.mubr.f32.gmra.mxu0 %v389
    %v1128 = vpop.f32.mrf.mxu0
    %v1129 = vadd.f32 0.0, %v1128
    %v1130 = vpop.f32.mrf.mxu0
    %1131 = vmatprep.mubr.f32.mxu0 0.0
    %1132 = vmatmul.mubr.f32.gmra.mxu0 %v392
    %v1133 = vpop.f32.mrf.mxu0
    %v1134 = vadd.f32 0.0, %v1133
    %v1135 = vpop.f32.mrf.mxu0
    %1136 = vdwg.mxu0
    %1137 = vmatprep.subr.mxu0 0.0
    %1138 = vmatpush1.msra.mxu0 0.0
    %1139 = vmatprep.subr.mxu0 0.0
    %1140 = vmatpush1.msra.mxu0 0.0
    %1141 = vmatprep.subr.mxu0 0.0
    %1142 = vmatpush1.msra.mxu0 0.0
    %1143 = vmatprep.subr.mxu0 0.0
    %1144 = vmatpush1.msra.mxu0 0.0
    %1145 = vmatprep.subr.mxu0 0.0
    %1146 = vmatpush1.msra.mxu0 0.0
    %1147 = vmatprep.subr.mxu0 0.0
    %1148 = vmatpush1.msra.mxu0 0.0
    %1149 = vmatprep.subr.mxu0 0.0
    %1150 = vmatpush1.msra.mxu0 0.0
    %1151 = vmatprep.subr.mxu0 0.0
    %1152 = vmatpush1.msra.mxu0 0.0
    %1153 = vmatprep.subr.mxu0 0.0
    %1154 = vmatpush1.msra.mxu0 0.0
    %1155 = vmatprep.subr.mxu0 0.0
    %1156 = vmatpush1.msra.mxu0 0.0
    %1157 = vmatprep.subr.mxu0 0.0
    %1158 = vmatpush1.msra.mxu0 0.0
    %1159 = vmatprep.subr.mxu0 0.0
    %1160 = vmatpush1.msra.mxu0 0.0
    %1161 = vmatprep.subr.mxu0 0.0
    %1162 = vmatpush1.msra.mxu0 0.0
    %1163 = vmatprep.subr.mxu0 0.0
    %1164 = vmatpush1.msra.mxu0 0.0
    %1165 = vmatprep.subr.mxu0 0.0
    %1166 = vmatpush1.msra.mxu0 0.0
    %1167 = vmatprep.subr.mxu0 0.0
    %1168 = vmatpush1.msra.mxu0 %v761
    %1169 = vmatprep.subr.mxu0 0.0
    %1170 = vmatpush2.msra.mxu0 0.0
    %1171 = vmatprep.subr.mxu0 0.0
    %1172 = vmatpush2.msra.mxu0 0.0
    %1173 = vmatprep.subr.mxu0 0.0
    %1174 = vmatpush2.msra.mxu0 0.0
    %1175 = vmatprep.subr.mxu0 0.0
    %1176 = vmatpush2.msra.mxu0 0.0
    %1177 = vmatprep.subr.mxu0 0.0
    %1178 = vmatpush2.msra.mxu0 0.0
    %1179 = vmatprep.subr.mxu0 0.0
    %1180 = vmatpush2.msra.mxu0 0.0
    %1181 = vmatprep.subr.mxu0 0.0
    %1182 = vmatpush2.msra.mxu0 0.0
    %1183 = vmatprep.subr.mxu0 0.0
    %1184 = vmatpush2.msra.mxu0 0.0
    %1185 = vmatprep.subr.mxu0 0.0
    %1186 = vmatpush2.msra.mxu0 0.0
    %1187 = vmatprep.subr.mxu0 0.0
    %1188 = vmatpush2.msra.mxu0 0.0
    %1189 = vmatprep.subr.mxu0 0.0
    %1190 = vmatpush2.msra.mxu0 0.0
    %1191 = vmatprep.subr.mxu0 0.0
    %1192 = vmatpush2.msra.mxu0 0.0
    %1193 = vmatprep.subr.mxu0 0.0
    %1194 = vmatpush2.msra.mxu0 0.0
    %1195 = vmatprep.subr.mxu0 0.0
    %1196 = vmatpush2.msra.mxu0 0.0
    %1197 = vmatprep.subr.mxu0 0.0
    %1198 = vmatpush2.msra.mxu0 0.0
    %1199 = vmatprep.subr.mxu0 0.0
    %1200 = vmatpush2.msra.mxu0 0.0
    %1201 = vmatprep.mubr.f32.mxu0 0.0
    %1202 = vmatmul.mubr.f32.gmra.mxu0 %v470
    %v1203 = vpop.f32.mrf.mxu0
    %v1204 = vadd.f32 0.0, %v1203
    %v1205 = vpop.f32.mrf.mxu0
    %1206 = vmatprep.mubr.f32.mxu0 0.0
    %1207 = vmatmul.mubr.f32.gmra.mxu0 %v473
    %v1208 = vpop.f32.mrf.mxu0
    %v1209 = vadd.f32 0.0, %v1208
    %v1210 = vpop.f32.mrf.mxu0
    %1211 = vdwg.mxu0
    %1212 = vmatprep.subr.mxu0 0.0
    %1213 = vmatpush1.msra.mxu0 0.0
    %1214 = vmatprep.subr.mxu0 0.0
    %1215 = vmatpush1.msra.mxu0 0.0
    %1216 = vmatprep.subr.mxu0 0.0
    %1217 = vmatpush1.msra.mxu0 0.0
    %1218 = vmatprep.subr.mxu0 0.0
    %1219 = vmatpush1.msra.mxu0 0.0
    %1220 = vmatprep.subr.mxu0 0.0
    %1221 = vmatpush1.msra.mxu0 0.0
    %1222 = vmatprep.subr.mxu0 0.0
    %1223 = vmatpush1.msra.mxu0 0.0
    %1224 = vmatprep.subr.mxu0 0.0
    %1225 = vmatpush1.msra.mxu0 0.0
    %1226 = vmatprep.subr.mxu0 0.0
    %1227 = vmatpush1.msra.mxu0 0.0
    %1228 = vmatprep.subr.mxu0 0.0
    %1229 = vmatpush1.msra.mxu0 0.0
    %1230 = vmatprep.subr.mxu0 0.0
    %1231 = vmatpush1.msra.mxu0 0.0
    %1232 = vmatprep.subr.mxu0 0.0
    %1233 = vmatpush1.msra.mxu0 0.0
    %1234 = vmatprep.subr.mxu0 0.0
    %1235 = vmatpush1.msra.mxu0 0.0
    %1236 = vmatprep.subr.mxu0 0.0
    %1237 = vmatpush1.msra.mxu0 0.0
    %1238 = vmatprep.subr.mxu0 0.0
    %1239 = vmatpush1.msra.mxu0 0.0
    %1240 = vmatprep.subr.mxu0 0.0
    %1241 = vmatpush1.msra.mxu0 0.0
    %1242 = vmatprep.subr.mxu0 0.0
    %1243 = vmatpush1.msra.mxu0 %v761
    %1244 = vmatprep.subr.mxu0 0.0
    %1245 = vmatpush2.msra.mxu0 0.0
    %1246 = vmatprep.subr.mxu0 0.0
    %1247 = vmatpush2.msra.mxu0 0.0
    %1248 = vmatprep.subr.mxu0 0.0
    %1249 = vmatpush2.msra.mxu0 0.0
    %1250 = vmatprep.subr.mxu0 0.0
    %1251 = vmatpush2.msra.mxu0 0.0
    %1252 = vmatprep.subr.mxu0 0.0
    %1253 = vmatpush2.msra.mxu0 0.0
    %1254 = vmatprep.subr.mxu0 0.0
    %1255 = vmatpush2.msra.mxu0 0.0
    %1256 = vmatprep.subr.mxu0 0.0
    %1257 = vmatpush2.msra.mxu0 0.0
    %1258 = vmatprep.subr.mxu0 0.0
    %1259 = vmatpush2.msra.mxu0 0.0
    %1260 = vmatprep.subr.mxu0 0.0
    %1261 = vmatpush2.msra.mxu0 0.0
    %1262 = vmatprep.subr.mxu0 0.0
    %1263 = vmatpush2.msra.mxu0 0.0
    %1264 = vmatprep.subr.mxu0 0.0
    %1265 = vmatpush2.msra.mxu0 0.0
    %1266 = vmatprep.subr.mxu0 0.0
    %1267 = vmatpush2.msra.mxu0 0.0
    %1268 = vmatprep.subr.mxu0 0.0
    %1269 = vmatpush2.msra.mxu0 0.0
    %1270 = vmatprep.subr.mxu0 0.0
    %1271 = vmatpush2.msra.mxu0 0.0
    %1272 = vmatprep.subr.mxu0 0.0
    %1273 = vmatpush2.msra.mxu0 0.0
    %1274 = vmatprep.subr.mxu0 0.0
    %1275 = vmatpush2.msra.mxu0 0.0
    %1276 = vmatprep.mubr.f32.mxu0 0.0
    %1277 = vmatmul.mubr.f32.gmra.mxu0 %v551
    %v1278 = vpop.f32.mrf.mxu0
    %v1279 = vadd.f32 0.0, %v1278
    %v1280 = vpop.f32.mrf.mxu0
    %1281 = vmatprep.mubr.f32.mxu0 0.0
    %1282 = vmatmul.mubr.f32.gmra.mxu0 %v554
    %v1283 = vpop.f32.mrf.mxu0
    %v1284 = vadd.f32 0.0, %v1283
    %v1285 = vpop.f32.mrf.mxu0
    %1286 = vdwg.mxu0
    %1287 = vmatprep.subr.mxu0 0.0
    %1288 = vmatpush1.msra.mxu0 0.0
    %1289 = vmatprep.subr.mxu0 0.0
    %1290 = vmatpush1.msra.mxu0 0.0
    %1291 = vmatprep.subr.mxu0 0.0
    %1292 = vmatpush1.msra.mxu0 0.0
    %1293 = vmatprep.subr.mxu0 0.0
    %1294 = vmatpush1.msra.mxu0 0.0
    %1295 = vmatprep.subr.mxu0 0.0
    %1296 = vmatpush1.msra.mxu0 0.0
    %1297 = vmatprep.subr.mxu0 0.0
    %1298 = vmatpush1.msra.mxu0 0.0
    %1299 = vmatprep.subr.mxu0 0.0
    %1300 = vmatpush1.msra.mxu0 0.0
    %1301 = vmatprep.subr.mxu0 0.0
    %1302 = vmatpush1.msra.mxu0 0.0
    %1303 = vmatprep.subr.mxu0 0.0
    %1304 = vmatpush1.msra.mxu0 0.0
    %1305 = vmatprep.subr.mxu0 0.0
    %1306 = vmatpush1.msra.mxu0 0.0
    %1307 = vmatprep.subr.mxu0 0.0
    %1308 = vmatpush1.msra.mxu0 0.0
    %1309 = vmatprep.subr.mxu0 0.0
    %1310 = vmatpush1.msra.mxu0 0.0
    %1311 = vmatprep.subr.mxu0 0.0
    %1312 = vmatpush1.msra.mxu0 0.0
    %1313 = vmatprep.subr.mxu0 0.0
    %1314 = vmatpush1.msra.mxu0 0.0
    %1315 = vmatprep.subr.mxu0 0.0
    %1316 = vmatpush1.msra.mxu0 0.0
    %1317 = vmatprep.subr.mxu0 0.0
    %1318 = vmatpush1.msra.mxu0 %v761
    %1319 = vmatprep.subr.mxu0 0.0
    %1320 = vmatpush2.msra.mxu0 0.0
    %1321 = vmatprep.subr.mxu0 0.0
    %1322 = vmatpush2.msra.mxu0 0.0
    %1323 = vmatprep.subr.mxu0 0.0
    %1324 = vmatpush2.msra.mxu0 0.0
    %1325 = vmatprep.subr.mxu0 0.0
    %1326 = vmatpush2.msra.mxu0 0.0
    %1327 = vmatprep.subr.mxu0 0.0
    %1328 = vmatpush2.msra.mxu0 0.0
    %1329 = vmatprep.subr.mxu0 0.0
    %1330 = vmatpush2.msra.mxu0 0.0
    %1331 = vmatprep.subr.mxu0 0.0
    %1332 = vmatpush2.msra.mxu0 0.0
    %1333 = vmatprep.subr.mxu0 0.0
    %1334 = vmatpush2.msra.mxu0 0.0
    %1335 = vmatprep.subr.mxu0 0.0
    %1336 = vmatpush2.msra.mxu0 0.0
    %1337 = vmatprep.subr.mxu0 0.0
    %1338 = vmatpush2.msra.mxu0 0.0
    %1339 = vmatprep.subr.mxu0 0.0
    %1340 = vmatpush2.msra.mxu0 0.0
    %1341 = vmatprep.subr.mxu0 0.0
    %1342 = vmatpush2.msra.mxu0 0.0
    %1343 = vmatprep.subr.mxu0 0.0
    %1344 = vmatpush2.msra.mxu0 0.0
    %1345 = vmatprep.subr.mxu0 0.0
    %1346 = vmatpush2.msra.mxu0 0.0
    %1347 = vmatprep.subr.mxu0 0.0
    %1348 = vmatpush2.msra.mxu0 0.0
    %1349 = vmatprep.subr.mxu0 0.0
    %1350 = vmatpush2.msra.mxu0 0.0
    %1351 = vmatprep.mubr.f32.mxu0 0.0
    %1352 = vmatmul.mubr.f32.gmra.mxu0 %v632
    %v1353 = vpop.f32.mrf.mxu0
    %v1354 = vadd.f32 0.0, %v1353
    %v1355 = vpop.f32.mrf.mxu0
    %1356 = vmatprep.mubr.f32.mxu0 0.0
    %1357 = vmatmul.mubr.f32.gmra.mxu0 %v635
    %v1358 = vpop.f32.mrf.mxu0
    %v1359 = vadd.f32 0.0, %v1358
    %v1360 = vpop.f32.mrf.mxu0
    %1361 = vdwg.mxu0
    %v1362 = vld [vmem:[#allocation2] sm:$0xff]
    %v1363 = vld [vmem:[#allocation2 + $0x8] sm:$0xff]
    %v1364 = vld [vmem:[#allocation2 + $0x18] sm:$0xff]
    %v1365 = vld [vmem:[#allocation2 + $0x20] sm:$0xff]
    %v1366 = vld [vmem:[#allocation2 + $0x30] sm:$0xff]
    %v1367 = vld [vmem:[#allocation2 + $0x38] sm:$0xff]
    %v1368 = vld [vmem:[#allocation2 + $0x48] sm:$0xff]
    %v1369 = vld [vmem:[#allocation2 + $0x50] sm:$0xff]
    %v1370 = vld [vmem:[#allocation2 + $0x60] sm:$0xff]
    %v1371 = vld [vmem:[#allocation2 + $0x68] sm:$0xff]
    %v1372 = vld [vmem:[#allocation2 + $0x78] sm:$0xff]
    %v1373 = vld [vmem:[#allocation2 + $0x80] sm:$0xff]
    %v1374 = vld [vmem:[#allocation2 + $0x90] sm:$0xff]
    %v1375 = vld [vmem:[#allocation2 + $0x98] sm:$0xff]
    %v1376 = vld [vmem:[#allocation2 + $0xa8] sm:$0xff]
    %v1377 = vld [vmem:[#allocation2 + $0xb0] sm:$0xff]
    %v1378 = vadd.f32 %v1362, %v829
    %v1379 = vadd.f32 %v1363, %v834
    %v1380 = vadd.f32 %v1364, %v904
    %v1381 = vadd.f32 %v1365, %v909
    %v1382 = vadd.f32 %v1366, %v979
    %v1383 = vadd.f32 %v1367, %v984
    %v1384 = vadd.f32 %v1368, %v1054
    %v1385 = vadd.f32 %v1369, %v1059
    %v1386 = vadd.f32 %v1370, %v1129
    %v1387 = vadd.f32 %v1371, %v1134
    %v1388 = vadd.f32 %v1372, %v1204
    %v1389 = vadd.f32 %v1373, %v1209
    %v1390 = vadd.f32 %v1374, %v1279
    %v1391 = vadd.f32 %v1375, %v1284
    %v1392 = vadd.f32 %v1376, %v1354
    %v1393 = vadd.f32 %v1377, %v1359
    %1394 = vst [vmem:[#allocation2] sm:$0xff] %v1378
    %1395 = vst [vmem:[#allocation2 + $0x8] sm:$0xff] %v1379
    %1396 = vst [vmem:[#allocation2 + $0x18] sm:$0xff] %v1380
    %1397 = vst [vmem:[#allocation2 + $0x20] sm:$0xff] %v1381
    %1398 = vst [vmem:[#allocation2 + $0x30] sm:$0xff] %v1382
    %1399 = vst [vmem:[#allocation2 + $0x38] sm:$0xff] %v1383
    %1400 = vst [vmem:[#allocation2 + $0x48] sm:$0xff] %v1384
    %1401 = vst [vmem:[#allocation2 + $0x50] sm:$0xff] %v1385
    %1402 = vst [vmem:[#allocation2 + $0x60] sm:$0xff] %v1386
    %1403 = vst [vmem:[#allocation2 + $0x68] sm:$0xff] %v1387
    %1404 = vst [vmem:[#allocation2 + $0x78] sm:$0xff] %v1388
    %1405 = vst [vmem:[#allocation2 + $0x80] sm:$0xff] %v1389
    %1406 = vst [vmem:[#allocation2 + $0x90] sm:$0xff] %v1390
    %1407 = vst [vmem:[#allocation2 + $0x98] sm:$0xff] %v1391
    %1408 = vst [vmem:[#allocation2 + $0xa8] sm:$0xff] %v1392
    %1409 = vst [vmem:[#allocation2 + $0xb0] sm:$0xff] %v1393
    %v1410 = vld [vmem:[#allocation2 + $0x10] sm:$0x1]
    %v1411 = vld [vmem:[#allocation2 + $0x28] sm:$0x1]
    %v1412 = vld [vmem:[#allocation2 + $0x40] sm:$0x1]
    %v1413 = vld [vmem:[#allocation2 + $0x58] sm:$0x1]
    %v1414 = vld [vmem:[#allocation2 + $0x70] sm:$0x1]
    %v1415 = vld [vmem:[#allocation2 + $0x88] sm:$0x1]
    %v1416 = vld [vmem:[#allocation2 + $0xa0] sm:$0x1]
    %v1417 = vld [vmem:[#allocation2 + $0xb8] sm:$0x1]
    %v1418 = vld [vmem:[%s2] sm:$0x1]
    %v1419 = vadd.f32 %v1410, %v1418
    %v1420 = vadd.f32 %v1411, %v1418
    %v1421 = vadd.f32 %v1412, %v1418
    %v1422 = vadd.f32 %v1413, %v1418
    %v1423 = vadd.f32 %v1414, %v1418
    %v1424 = vadd.f32 %v1415, %v1418
    %v1425 = vadd.f32 %v1416, %v1418
    %v1426 = vadd.f32 %v1417, %v1418
    %v1427 = vmax.f32 %v1419, 0.0
    %v1428 = vmax.f32 %v1420, 0.0
    %v1429 = vmax.f32 %v1421, 0.0
    %v1430 = vmax.f32 %v1422, 0.0
    %v1431 = vmax.f32 %v1423, 0.0
    %v1432 = vmax.f32 %v1424, 0.0
    %v1433 = vmax.f32 %v1425, 0.0
    %v1434 = vmax.f32 %v1426, 0.0
    %v1435 = vld [vmem:[%s3] sm:$0x1]
    %v1436 = vmul.f32 %v1427, %v1435
    %v1437 = vmul.f32 %v1428, %v1435
    %v1438 = vmul.f32 %v1429, %v1435
    %v1439 = vmul.f32 %v1430, %v1435
    %v1440 = vmul.f32 %v1431, %v1435
    %v1441 = vmul.f32 %v1432, %v1435
    %v1442 = vmul.f32 %v1433, %v1435
    %v1443 = vmul.f32 %v1434, %v1435
    %vm1444 = vcmask 1040384
    %v1445 = vsel %vm1444, %v1436, 0.0
    %1446 = vadd.xlane.f32.xlu0 %v1445
    %v1447 = vpop.xlane.xlu0 %1446
    %v1448 = vsel %vm1444, %v1437, 0.0
    %1449 = vadd.xlane.f32.xlu0 %v1448
    %v1450 = vpop.xlane.xlu0 %1449
    %v1451 = vsel %vm1444, %v1438, 0.0
    %1452 = vadd.xlane.f32.xlu0 %v1451
    %v1453 = vpop.xlane.xlu0 %1452
    %v1454 = vsel %vm1444, %v1439, 0.0
    %1455 = vadd.xlane.f32.xlu0 %v1454
    %v1456 = vpop.xlane.xlu0 %1455
    %v1457 = vsel %vm1444, %v1440, 0.0
    %1458 = vadd.xlane.f32.xlu0 %v1457
    %v1459 = vpop.xlane.xlu0 %1458
    %v1460 = vsel %vm1444, %v1441, 0.0
    %1461 = vadd.xlane.f32.xlu0 %v1460
    %v1462 = vpop.xlane.xlu0 %1461
    %v1463 = vsel %vm1444, %v1442, 0.0
    %1464 = vadd.xlane.f32.xlu0 %v1463
    %v1465 = vpop.xlane.xlu0 %1464
    %v1466 = vsel %vm1444, %v1443, 0.0
    %1467 = vadd.xlane.f32.xlu0 %v1466
    %v1468 = vpop.xlane.xlu0 %1467
    %s1469 = sld [smem:[#allocation3]]
    %v1470 = vstv %s1469
    %v1471 = vadd.f32 %v1447, %v1470
    %v1472 = vadd.f32 %v1450, %v1470
    %v1473 = vadd.f32 %v1453, %v1470
    %v1474 = vadd.f32 %v1456, %v1470
    %v1475 = vadd.f32 %v1459, %v1470
    %v1476 = vadd.f32 %v1462, %v1470
    %v1477 = vadd.f32 %v1465, %v1470
    %v1478 = vadd.f32 %v1468, %v1470
    %1479 = vst [vmem:[#allocation4] sm:$0x1] %v1471
    %1480 = vst [vmem:[#allocation4 + $0x1] sm:$0x1] %v1472
    %1481 = vst [vmem:[#allocation4 + $0x2] sm:$0x1] %v1473
    %1482 = vst [vmem:[#allocation4 + $0x3] sm:$0x1] %v1474
    %1483 = vst [vmem:[#allocation4 + $0x4] sm:$0x1] %v1475
    %1484 = vst [vmem:[#allocation4 + $0x5] sm:$0x1] %v1476
    %1485 = vst [vmem:[#allocation4 + $0x6] sm:$0x1] %v1477
    %1486 = vst [vmem:[#allocation4 + $0x7] sm:$0x1] %v1478
    // Predicated region
    $region22: #{tpu_custom_call.1} parent=1 // pred_check
      _
    $region23: #{tpu_custom_call.1} parent=1 // pred_check_branch
      %1488 = sbr.rel (0) target = $region25
    $region24: #{tpu_custom_call.1} parent=1 // pred_region
      %s1490 = ssub.s32 128, 128
      %1491 = vsyncadd [#allocation5], %s1490
      %s1492 = sshll.u32 [#allocation4], 4
      %s1493 = int_to_ptr.vmem [resolvable:$true] %s1492
      %1498 = dma.vmem_to_hbm [thread:$0]  %s1493, 128, %s5, [#allocation5], 16, 16, 1
    $region25: #{tpu_custom_call.1} parent=1 // pred_fallthru
      _
    // Predicated region
    $region26: #{tpu_custom_call.1} parent=1 // pred_check
      _
    $region27: #{tpu_custom_call.1} parent=1 // pred_check_branch
      %1500 = sbr.rel (0) target = $region29
    $region28: #{tpu_custom_call.1} parent=1 // pred_region
      %1501 = dma.done [#allocation5], 128
    $region29: #{tpu_custom_call.1} parent=1 // pred_fallthru
      _
    %1502 = vsyncpa [#allocation5], 1

</llo_original>
